<compile_context>
chip_gen: v5e
topology: v5e:2x2
jax: 0.10.0
libtpu: 0.0.40
codegen_flags: <defaults>
</compile_context>

<pallas_src>
import functools

import jax
import jax.numpy as jnp
from jax.experimental import pallas as pl
from jax.experimental.pallas import tpu as pltpu


def _round_up(x, m):
    return (x + m - 1) // m * m


_VMEM_BUDGET = 12 * 1024 * 1024          # double-buffered working-set cap per matmul call
_VMEM_LIMIT = 32 * 1024 * 1024           # scoped VMEM request (<= physical on v5e/v6e/v7x)


def _largest_tile(n, cap):
    """Largest multiple of 128 that divides n (n is a multiple of 128) and is <= cap."""
    nb = n // 128
    best = 1
    for d in range(1, nb + 1):
        if nb % d == 0 and d * 128 <= cap:
            best = d
    return best * 128


def _pick_row_tile(M, prefs=(512, 256, 128, 64, 32, 16, 8)):
    for cand in prefs:
        if M % cand == 0:
            return cand
    return M


def _pick_tiles(M, Kp, Np, has_res):
    """tm/tn/tk selection: collapse the grid for small-M (weight-streaming bound) layers,
    take a single K step whenever the double-buffered working set fits the budget."""
    if M <= 256:
        tm = _round_up(max(M, 1), 8)
        Mp = tm
    elif M % 512 == 0 and Kp <= 2048:
        tm = 512
        Mp = M
    else:
        tm = 256
        Mp = _round_up(M, 256)
    tn = _largest_tile(Np, 512)

    fixed = 2 * tm * tn * 2 + (2 * tm * tn * 2 if has_res else 0) + 32 * tn

    def fits(tk, multi_k):
        acc = tm * tn * 4 if multi_k else 0
        return fixed + acc + 2 * tm * tk * 2 + 2 * tk * tn * 2 <= _VMEM_BUDGET

    if fits(Kp, False):
        tk = Kp
    else:
        nb = Kp // 128
        tk = 128
        for d in range(1, nb + 1):
            if nb % d == 0 and fits(d * 128, True):
                tk = d * 128
    return tm, tn, tk, Mp


# ---------------------------------------------------------------------------
# Pallas kernels
# ---------------------------------------------------------------------------
def _epilogue(acc, scale, shift, res, act, alpha):
    y = acc * scale + shift
    if res is not None:
        y = y + res.astype(jnp.float32)
    if act == "relu":
        y = jnp.maximum(y, 0.0)
    elif act == "prelu":
        y = jnp.where(y > 0.0, y, alpha * y)
    return y


# --- single-K-step kernels: no accumulator scratch, no pl.when phases ---
def _mm1_kernel(a_ref, w_ref, s_ref, b_ref, o_ref, *, act, alpha):
    acc = jnp.dot(a_ref[...], w_ref[...], preferred_element_type=jnp.float32)
    o_ref[...] = _epilogue(acc, s_ref[...], b_ref[...], None, act, alpha).astype(o_ref.dtype)


def _mm1_res_kernel(a_ref, w_ref, s_ref, b_ref, r_ref, o_ref, *, act, alpha):
    acc = jnp.dot(a_ref[...], w_ref[...], preferred_element_type=jnp.float32)
    o_ref[...] = _epilogue(acc, s_ref[...], b_ref[...], r_ref[...], act,
                           alpha).astype(o_ref.dtype)


# --- multi-K-step kernels: fp32 accumulator in VMEM scratch ---
def _mmk_kernel(a_ref, w_ref, s_ref, b_ref, o_ref, acc_ref, *, act, alpha):
    @pl.when(pl.program_id(2) == 0)
    def _():
        acc_ref[...] = jnp.zeros_like(acc_ref)

    acc_ref[...] += jnp.dot(a_ref[...], w_ref[...], preferred_element_type=jnp.float32)

    @pl.when(pl.program_id(2) == pl.num_programs(2) - 1)
    def _():
        o_ref[...] = _epilogue(acc_ref[...], s_ref[...], b_ref[...], None, act,
                               alpha).astype(o_ref.dtype)


def _mmk_res_kernel(a_ref, w_ref, s_ref, b_ref, r_ref, o_ref, acc_ref, *, act, alpha):
    @pl.when(pl.program_id(2) == 0)
    def _():
        acc_ref[...] = jnp.zeros_like(acc_ref)

    acc_ref[...] += jnp.dot(a_ref[...], w_ref[...], preferred_element_type=jnp.float32)

    @pl.when(pl.program_id(2) == pl.num_programs(2) - 1)
    def _():
        o_ref[...] = _epilogue(acc_ref[...], s_ref[...], b_ref[...], r_ref[...], act,
                               alpha).astype(o_ref.dtype)


def fused_matmul(A, Wp, scale_p, shift_p, *, act="none", alpha=0.25, residual=None,
                 out_dtype=jnp.bfloat16):
    """out = act((A @ W) * scale + shift [+ residual]).

    Wp (Kp, Np) bf16 and scale_p/shift_p (1, Np) f32 are pre-padded in build_params
    (no per-forward weight traffic).  A is only padded when K < Kp.  Returns the full
    (M, Np) result; padded output channels are exactly zero (scale/shift zero-padded),
    so callers keep channel padding instead of slicing."""
    M, K = A.shape
    Kp, Np = Wp.shape
    has_res = residual is not None
    tm, tn, tk, Mp = _pick_tiles(M, Kp, Np, has_res)

    A_p = A.astype(jnp.bfloat16)
    if (Mp, Kp) != (M, K):
        A_p = jnp.pad(A_p, ((0, Mp - M), (0, Kp - K)))
    if has_res:
        R = residual.astype(jnp.bfloat16)
        rm, rn = R.shape
        if (Mp, Np) != (rm, rn):
            R = jnp.pad(R, ((0, Mp - rm), (0, Np - rn)))

    nk = Kp // tk
    out_shape = jax.ShapeDtypeStruct((Mp, Np), out_dtype)

    if nk == 1:
        grid = (Mp // tm, Np // tn)
        a_spec = pl.BlockSpec((tm, tk), lambda i, j: (i, 0))
        w_spec = pl.BlockSpec((tk, tn), lambda i, j: (0, j))
        v_spec = pl.BlockSpec((1, tn), lambda i, j: (0, j))
        o_spec = pl.BlockSpec((tm, tn), lambda i, j: (i, j))
        cp = pltpu.CompilerParams(dimension_semantics=("parallel", "parallel"),
                                  vmem_limit_bytes=_VMEM_LIMIT)
        if has_res:
            r_spec = pl.BlockSpec((tm, tn), lambda i, j: (i, j))
            out = pl.pallas_call(
                functools.partial(_mm1_res_kernel, act=act, alpha=alpha),
                out_shape=out_shape,
                grid_spec=pltpu.PrefetchScalarGridSpec(
                    num_scalar_prefetch=0, grid=grid,
                    in_specs=[a_spec, w_spec, v_spec, v_spec, r_spec],
                    out_specs=o_spec),
                compiler_params=cp,
            )(A_p, Wp, scale_p, shift_p, R)
        else:
            out = pl.pallas_call(
                functools.partial(_mm1_kernel, act=act, alpha=alpha),
                out_shape=out_shape,
                grid_spec=pltpu.PrefetchScalarGridSpec(
                    num_scalar_prefetch=0, grid=grid,
                    in_specs=[a_spec, w_spec, v_spec, v_spec],
                    out_specs=o_spec),
                compiler_params=cp,
            )(A_p, Wp, scale_p, shift_p)
    else:
        grid = (Mp // tm, Np // tn, nk)
        a_spec = pl.BlockSpec((tm, tk), lambda i, j, k: (i, k))
        w_spec = pl.BlockSpec((tk, tn), lambda i, j, k: (k, j))
        v_spec = pl.BlockSpec((1, tn), lambda i, j, k: (0, j))
        o_spec = pl.BlockSpec((tm, tn), lambda i, j, k: (i, j))
        scratch = [pltpu.VMEM((tm, tn), jnp.float32)]
        cp = pltpu.CompilerParams(
            dimension_semantics=("parallel", "parallel", "arbitrary"),
            vmem_limit_bytes=_VMEM_LIMIT)
        if has_res:
            r_spec = pl.BlockSpec((tm, tn), lambda i, j, k: (i, j))
            out = pl.pallas_call(
                functools.partial(_mmk_res_kernel, act=act, alpha=alpha),
                out_shape=out_shape,
                grid_spec=pltpu.PrefetchScalarGridSpec(
                    num_scalar_prefetch=0, grid=grid,
                    in_specs=[a_spec, w_spec, v_spec, v_spec, r_spec],
                    out_specs=o_spec, scratch_shapes=scratch),
                compiler_params=cp,
            )(A_p, Wp, scale_p, shift_p, R)
        else:
            out = pl.pallas_call(
                functools.partial(_mmk_kernel, act=act, alpha=alpha),
                out_shape=out_shape,
                grid_spec=pltpu.PrefetchScalarGridSpec(
                    num_scalar_prefetch=0, grid=grid,
                    in_specs=[a_spec, w_spec, v_spec, v_spec],
                    out_specs=o_spec, scratch_shapes=scratch),
                compiler_params=cp,
            )(A_p, Wp, scale_p, shift_p)
    return out if Mp == M else out[:M]


def _scale_shift_relu_kernel(x_ref, s_ref, b_ref, o_ref):
    y = x_ref[...].astype(jnp.float32) * s_ref[...] + b_ref[...]
    o_ref[...] = jnp.maximum(y, 0.0).astype(o_ref.dtype)


def scale_shift_relu(x, scale, shift):
    """relu(x * scale + shift) per channel (BN1+ReLU after the shared conv1); C is 128 so the
    stores are lane-dense."""
    shape = x.shape
    C = shape[-1]
    M = x.size // C
    x2 = x.reshape(M, C)
    tm = _pick_row_tile(M)
    out = pl.pallas_call(
        _scale_shift_relu_kernel,
        out_shape=jax.ShapeDtypeStruct((M, C), x.dtype),
        grid=(M // tm,),
        in_specs=[pl.BlockSpec((tm, C), lambda i: (i, 0)),
                  pl.BlockSpec((1, C), lambda i: (0, 0)),
                  pl.BlockSpec((1, C), lambda i: (0, 0))],
        out_specs=pl.BlockSpec((tm, C), lambda i: (i, 0)),
    )(x2, scale, shift)
    return out.reshape(shape)


def _maxpool_kernel(p_ref, o_ref):
    x = p_ref[0]
    for t in range(1, p_ref.shape[0]):
        x = jnp.maximum(x, p_ref[t])
    o_ref[...] = x


def maxpool2d(x, k=3, stride=2, pad=1):
    """3x3/2 maxpool; taps on the leading axis so the in-kernel reduction needs no relayout.
    Zero-padded channels stay exactly zero (every window covers a valid position)."""
    B, H, W, C = x.shape
    xp = jnp.pad(x, ((0, 0), (pad, pad), (pad, pad), (0, 0)), constant_values=-jnp.inf)
    Ho = (H + 2 * pad - k) // stride + 1
    Wo = (W + 2 * pad - k) // stride + 1
    taps = [xp[:, i:i + stride * Ho:stride, j:j + stride * Wo:stride, :]
            for i in range(k) for j in range(k)]
    M = B * Ho * Wo
    P = jnp.stack(taps, axis=0).reshape(k * k, M, C)
    tm = _pick_row_tile(M)
    out = pl.pallas_call(
        _maxpool_kernel,
        out_shape=jax.ShapeDtypeStruct((M, C), x.dtype),
        grid=(M // tm,),
        in_specs=[pl.BlockSpec((k * k, tm, C), lambda i: (0, i, 0))],
        out_specs=pl.BlockSpec((tm, C), lambda i: (i, 0)),
    )(P)
    return out.reshape(B, Ho, Wo, C)


# ---------------------------------------------------------------------------
# Conv built on the Pallas matmul kernel (patch extraction is plain-JAX glue)
# ---------------------------------------------------------------------------
def _extract_patches(x, kh, kw, stride, pad):
    # TODO(synk): still materialized in HBM; in-kernel tap-shifted loads left out.
    B, H, W, C = x.shape
    xp = jnp.pad(x, ((0, 0), (pad, pad), (pad, pad), (0, 0)))
    Ho = (H + 2 * pad - kh) // stride + 1
    Wo = (W + 2 * pad - kw) // stride + 1
    taps = [xp[:, i:i + stride * Ho:stride, j:j + stride * Wo:stride, :]
            for i in range(kh) for j in range(kw)]
    return jnp.stack(taps, axis=3), Ho, Wo  # (B, Ho, Wo, kh*kw, C)


def conv2d(x, Wm, scale, shift, kh, kw, stride=1, pad=0, act="none", alpha=0.25,
           residual=None):
    """Conv2d with pre-padded (Kp, Np) bf16 weights, folded BN and fused activation.
    1x1 convs skip patch extraction; the optional residual is added in the matmul epilogue."""
    B, H, W, Cin = x.shape
    if kh == 1 and kw == 1:
        xs = x[:, ::stride, ::stride, :] if stride > 1 else x
        Ho, Wo = xs.shape[1], xs.shape[2]
        A = xs.reshape(B * Ho * Wo, Cin)
    else:
        patches, Ho, Wo = _extract_patches(x, kh, kw, stride, pad)
        A = patches.reshape(B * Ho * Wo, kh * kw * Cin)
    res2 = residual.reshape(B * Ho * Wo, -1) if residual is not None else None
    out = fused_matmul(A, Wm, scale, shift, act=act, alpha=alpha, residual=res2)
    return out.reshape(B, Ho, Wo, -1)


# ---------------------------------------------------------------------------
# Transposed convolutions (decoder)
# ---------------------------------------------------------------------------
def _shifted_inputs(x):
    B, H, W, C = x.shape
    xp = jnp.pad(x, ((0, 0), (0, 1), (0, 1), (0, 0)))   # bottom/right zero pad
    x_r = xp[:, :H, 1:, :]                               # x[m, n+1]
    x_b = xp[:, 1:, :W, :]                               # x[m+1, n]
    x_d = xp[:, 1:, 1:, :]                               # x[m+1, n+1]
    return x_r, x_b, x_d


def _interleave_phases(y4):
    """y4: (B, H, W, 4, C), phase order [ee, eo, oe, oo] -> (B, 2H, 2W, C)."""
    B, H, W, _, C = y4.shape
    y = y4.reshape(B, H, W, 2, 2, C).transpose(0, 1, 3, 2, 4, 5)
    return y.reshape(B, 2 * H, 2 * W, C)


def deconv_stride2_wide(x, d, alpha=0.25):
    """Stride-2 transposed conv, large Cin (deconv1-3, M<=128, weight-streaming bound):
    4 dense per-phase matmuls so weight bytes stay at exactly 9*Cin*Cout."""
    B, H, W, C = x.shape
    x_r, x_b, x_d = _shifted_inputs(x)
    M = B * H * W
    sc, sh, act = d["scale"], d["shift"], d["act"]
    Cout = d["cout_p"]

    A_ee = x.reshape(M, C)
    A_eo = jnp.concatenate([x, x_r], axis=-1).reshape(M, 2 * C)
    A_oe = jnp.concatenate([x, x_b], axis=-1).reshape(M, 2 * C)
    A_oo = jnp.concatenate([x, x_r, x_b, x_d], axis=-1).reshape(M, 4 * C)

    y_ee = fused_matmul(A_ee, d["Wee"], sc, sh, act=act, alpha=alpha)
    y_eo = fused_matmul(A_eo, d["Weo"], sc, sh, act=act, alpha=alpha)
    y_oe = fused_matmul(A_oe, d["Woe"], sc, sh, act=act, alpha=alpha)
    y_oo = fused_matmul(A_oo, d["Woo"], sc, sh, act=act, alpha=alpha)

    y4 = jnp.stack([y_ee, y_eo, y_oe, y_oo], axis=1).reshape(B, H, W, 4, Cout)
    return _interleave_phases(y4)


def deconv_stride2_packed(x, d, alpha=0.25):
    """Stride-2 transposed conv, small Cin (deconv5/6): ONE matmul with a phase-packed
    (4*Cin, 4*Cout) weight (zero blocks are negligible at small Cin) -> 4 launches become 1."""
    B, H, W, C = x.shape
    x_r, x_b, x_d = _shifted_inputs(x)
    M = B * H * W
    A = jnp.concatenate([x, x_r, x_b, x_d], axis=-1).reshape(M, 4 * C)
    out = fused_matmul(A, d["Wpk"], d["scale4"], d["shift4"], act=d["act"], alpha=alpha)
    y4 = out.reshape(B, H, W, 4, d["cout_p"])
    return _interleave_phases(y4)


def run_deconv(x, d, alpha=0.25):
    if d["stride"] == 2:
        if d["packed"]:
            return deconv_stride2_packed(x, d, alpha=alpha)
        return deconv_stride2_wide(x, d, alpha=alpha)
    # stride=1, pad=1 transposed conv == 3x3 conv with the (pre-)flipped kernel
    return conv2d(x, d["Wm"], d["scale"], d["shift"], 3, 3, stride=1, pad=1,
                  act=d["act"], alpha=alpha)


# ---------------------------------------------------------------------------
# Deterministic parameter construction (synthetic, no checkpoint load).
# Every weight transpose/flip, BN folding, channel pad and bf16 cast happens here, once.
# ---------------------------------------------------------------------------
class ParamGen:
    def __init__(self, seed=0):
        self._key = jax.random.PRNGKey(seed)

    def normal(self, shape, scale=0.05):
        self._key, sub = jax.random.split(self._key)
        return scale * jax.random.normal(sub, shape, dtype=jnp.float32)


def make_bn(pg, c, eps=1e-5):
    gamma = 1.0 + pg.normal((c,), 0.1)
    beta = pg.normal((c,), 0.1)
    mean = pg.normal((c,), 0.1)
    var = 1.0 + jnp.abs(pg.normal((c,), 0.1))
    s = gamma / jnp.sqrt(var + eps)
    b = beta - mean * s
    return s, b


def make_conv_w(pg, cout, cin, k):
    return pg.normal((cout, cin, k, k), (2.0 / (cin * k * k)) ** 0.5)


def pad_vec(v, Np):
    v = v.astype(jnp.float32)
    return jnp.pad(v, (0, Np - v.shape[0])).reshape(1, Np)


def _expand_cin_oihw(w, seg):
    """Zero-pad each input-channel segment of an OIHW weight to its padded width."""
    if all(r == p for r, p in seg):
        return w
    parts, off = [], 0
    for real, padded in seg:
        blk = w[:, off:off + real]
        off += real
        if padded > real:
            blk = jnp.pad(blk, ((0, 0), (0, padded - real), (0, 0), (0, 0)))
        parts.append(blk)
    return jnp.concatenate(parts, axis=1)


def conv_w_to_matmul(w_oihw, seg=None):
    """OIHW conv weight -> pre-padded (Kp, Np) bf16 matmul weight (im2col tap-major rows)."""
    if seg is not None:
        w_oihw = _expand_cin_oihw(w_oihw, seg)
    cout, cin, kh, kw = w_oihw.shape
    Wm = jnp.transpose(w_oihw, (2, 3, 1, 0)).reshape(kh * kw * cin, cout)
    K, N = Wm.shape
    Kp = _round_up(K, 128)
    Np = _round_up(N, 128)
    return jnp.pad(Wm, ((0, Kp - K), (0, Np - N))).astype(jnp.bfloat16)


def make_bottleneck_params(pg, cin_real, cin_pad, planes, stride, has_ds):
    planes_pad = _round_up(planes, 128)
    cout = planes * 4
    seg_in = [(cin_real, cin_pad)]
    seg_mid = [(planes, planes_pad)]
    p = {"stride": stride, "has_ds": has_ds}
    p["Wm1"] = conv_w_to_matmul(make_conv_w(pg, planes, cin_real, 1), seg_in)
    s, b = make_bn(pg, planes)
    p["s1"], p["b1"] = pad_vec(s, planes_pad), pad_vec(b, planes_pad)
    p["Wm2"] = conv_w_to_matmul(make_conv_w(pg, planes, planes, 3), seg_mid)
    s, b = make_bn(pg, planes)
    p["s2"], p["b2"] = pad_vec(s, planes_pad), pad_vec(b, planes_pad)
    p["Wm3"] = conv_w_to_matmul(make_conv_w(pg, cout, planes, 1), seg_mid)
    s, b = make_bn(pg, cout)
    p["s3"], p["b3"] = pad_vec(s, cout), pad_vec(b, cout)
    if has_ds:
        p["Wmd"] = conv_w_to_matmul(make_conv_w(pg, cout, cin_real, 1), seg_in)
        s, b = make_bn(pg, cout)
        p["sd"], p["bd"] = pad_vec(s, cout), pad_vec(b, cout)
    return p


def make_deconv_params(pg, cin, cout, stride, with_act, in_seg=None):
    """ConvTranspose2d(3x3) [+ folded BN + ReLU].  in_seg describes the (real, padded)
    channel layout of the incoming (possibly channel-padded / concatenated) activation."""
    if in_seg is None:
        in_seg = [(cin, cin)]
    assert sum(r for r, _ in in_seg) == cin
    cin_pad = sum(p for _, p in in_seg)
    cout_p = _round_up(cout, 128)

    w = pg.normal((cin, cout, 3, 3), (2.0 / (cin * 9)) ** 0.5)   # PyTorch IOHW
    bias = pg.normal((cout,), 0.02)
    if with_act:
        s, b = make_bn(pg, cout)
        scale = s
        shift = bias * s + b                  # BN(conv + bias) folded into one scale/shift
        act = "relu"
    else:
        scale = jnp.ones((cout,), jnp.float32)
        shift = bias
        act = "none"
    d = {"stride": stride, "act": act, "cout": cout, "cout_p": cout_p}

    def tap(i, j):
        """(cin_pad, cout_p) slice of the transposed-conv weight with padded-channel rows/cols."""
        t = w[:, :, i, j]
        parts, off = [], 0
        for real, padded in in_seg:
            blk = t[off:off + real]
            off += real
            if padded > real:
                blk = jnp.pad(blk, ((0, padded - real), (0, 0)))
            parts.append(blk)
        t = jnp.concatenate(parts, axis=0) if len(parts) > 1 else parts[0]
        return jnp.pad(t, ((0, 0), (0, cout_p - cout)))

    if stride == 2:
        # sub-pixel phases:  y[2m,2n]=t(1,1);  y[2m,2n+1]=t(1,2)+t(1,0)@x_r;
        #                    y[2m+1,2n]=t(2,1)+t(0,1)@x_b;  y[2m+1,2n+1]=t(2,2)+t(2,0)@x_r+t(0,2)@x_b+t(0,0)@x_d
        packed = cin_pad <= 256
        d["packed"] = packed
        if packed:
            Z = jnp.zeros((cin_pad, cout_p), jnp.float32)
            cols = [
                jnp.concatenate([tap(1, 1), Z, Z, Z], axis=0),                           # ee
                jnp.concatenate([tap(1, 2), tap(1, 0), Z, Z], axis=0),                   # eo
                jnp.concatenate([tap(2, 1), Z, tap(0, 1), Z], axis=0),                   # oe
                jnp.concatenate([tap(2, 2), tap(2, 0), tap(0, 2), tap(0, 0)], axis=0),   # oo
            ]
            d["Wpk"] = jnp.concatenate(cols, axis=1).astype(jnp.bfloat16)
            sp = jnp.pad(scale.astype(jnp.float32), (0, cout_p - cout))
            bp = jnp.pad(shift.astype(jnp.float32), (0, cout_p - cout))
            d["scale4"] = jnp.tile(sp, 4).reshape(1, 4 * cout_p)
            d["shift4"] = jnp.tile(bp, 4).reshape(1, 4 * cout_p)
        else:
            d["Wee"] = tap(1, 1).astype(jnp.bfloat16)
            d["Weo"] = jnp.concatenate([tap(1, 2), tap(1, 0)], axis=0).astype(jnp.bfloat16)
            d["Woe"] = jnp.concatenate([tap(2, 1), tap(0, 1)], axis=0).astype(jnp.bfloat16)
            d["Woo"] = jnp.concatenate([tap(2, 2), tap(2, 0), tap(0, 2), tap(0, 0)],
                                       axis=0).astype(jnp.bfloat16)
            d["scale"] = pad_vec(scale, cout_p)
            d["shift"] = pad_vec(shift, cout_p)
    else:
        # stride 1, pad 1 -> ordinary conv with flipped kernel
        w_oihw = jnp.transpose(w[:, :, ::-1, ::-1], (1, 0, 2, 3))
        d["Wm"] = conv_w_to_matmul(w_oihw, seg=in_seg)
        d["scale"] = pad_vec(scale, cout_p)
        d["shift"] = pad_vec(shift, cout_p)
    return d


def build_params(seed=0):
    pg = ParamGen(seed)
    rp = {}
    # conv1: 7x7/2, 3->64; output kept zero-padded to 128 channels end-to-end.
    rp["conv1_Wm"] = conv_w_to_matmul(make_conv_w(pg, 64, 3, 7))           # (256, 128)
    rp["conv1_scale"] = jnp.ones((1, 128), jnp.float32)
    rp["conv1_shift"] = jnp.zeros((1, 128), jnp.float32)
    s, b = make_bn(pg, 64)
    rp["bn1_s"], rp["bn1_b"] = pad_vec(s, 128), pad_vec(b, 128)

    layers = []
    inplanes_real, inplanes_pad = 64, 128         # maxpool output is the 128-padded conv1 act
    for planes, blocks, stride in [(64, 3, 1), (128, 4, 2), (256, 6, 2), (512, 3, 2)]:
        blk_list = []
        for bi in range(blocks):
            st = stride if bi == 0 else 1
            has_ds = bi == 0
            blk_list.append(make_bottleneck_params(pg, inplanes_real, inplanes_pad,
                                                   planes, st, has_ds))
            inplanes_real = inplanes_pad = planes * 4
        layers.append(blk_list)
    rp["layers"] = layers

    seg64x2 = [(64, 128), (64, 128)]              # [deconv output | skip], both 128-padded
    dp = [
        make_deconv_params(pg, 2048, 1024, 2, True),                 # deconv1
        make_deconv_params(pg, 2048, 512, 2, True),                  # deconv2 (1024+1024)
        make_deconv_params(pg, 1024, 256, 2, True),                  # deconv3 (512+512)
        make_deconv_params(pg, 512, 64, 1, True),                    # deconv4 (256+256)
        make_deconv_params(pg, 128, 64, 2, True, in_seg=seg64x2),    # deconv5 (64+64, padded)
        make_deconv_params(pg, 128, 3, 2, True, in_seg=seg64x2),     # deconv6 (64+64, padded)
        make_deconv_params(pg, 3, 1, 1, False),                      # deconv7 (no activation)
    ]
    return rp, dp


# ---------------------------------------------------------------------------
# Forward pass (mirrors extractNet_resnet_prelu.forward with its hooks)
# ---------------------------------------------------------------------------
def bottleneck(x, p):
    stride, has_ds = p["stride"], p["has_ds"]
    out = conv2d(x, p["Wm1"], p["s1"], p["b1"], 1, 1, act="relu")
    out = conv2d(out, p["Wm2"], p["s2"], p["b2"], 3, 3, stride=stride, pad=1, act="relu")
    ds = None
    if has_ds:
        ds = conv2d(x, p["Wmd"], p["sd"], p["bd"], 1, 1, stride=stride, act="none")
        identity = ds
    else:
        identity = x
    # residual add + final ReLU fused into the conv3 matmul epilogue
    out = conv2d(out, p["Wm3"], p["s3"], p["b3"], 1, 1, act="relu", residual=identity)
    return out, ds


def extract_net_forward(img_nchw, rp, dp):
    x = jnp.transpose(img_nchw, (0, 2, 3, 1)).astype(jnp.bfloat16)  # NCHW -> NHWC (bf16)

    # ----- encoder (ResNet-50 body), capturing the hooked activations -----
    # conv1 (hook = pre-BN output) computed once; BN1+ReLU applied by a fused kernel after.
    e_conv1 = conv2d(x, rp["conv1_Wm"], rp["conv1_scale"], rp["conv1_shift"],
                     7, 7, stride=2, pad=3, act="none")              # (B,32,32,128), 64 real ch
    h = scale_shift_relu(e_conv1, rp["bn1_s"], rp["bn1_b"])
    e_maxpool = maxpool2d(h, 3, 2, 1)                                # hook: resnet.maxpool
    h = e_maxpool
    ds_feats = []
    for blk_list in rp["layers"]:
        for p in blk_list:
            h, ds = bottleneck(h, p)
            if ds is not None:
                ds_feats.append(ds)          # hooks: layerN[0].downsample[-1] (BN output)
    e_ds1, e_ds2, e_ds3 = ds_feats[0], ds_feats[1], ds_feats[2]
    e_layer4 = h                             # hook: layer4[-1].relu (last firing)

    # ----- decoder -----
    out = run_deconv(e_layer4, dp[0])
    out = jnp.concatenate([out, e_ds3], axis=-1)       # cat dim=1 (channels) == axis -1 (NHWC)
    out = run_deconv(out, dp[1])
    out = jnp.concatenate([out, e_ds2], axis=-1)
    out = run_deconv(out, dp[2])
    out = jnp.concatenate([out, e_ds1], axis=-1)
    out = run_deconv(out, dp[3])                       # (B,16,16,128), 64 real channels
    out = jnp.concatenate([out, e_maxpool], axis=-1)   # padded layout [(64,128),(64,128)]
    out = run_deconv(out, dp[4])                       # (B,32,32,128), 64 real channels
    out = jnp.concatenate([out, e_conv1], axis=-1)
    out = run_deconv(out, dp[5])                       # (B,64,64,128), 3 real channels
    out = out[..., :3]                                 # real channels for deconv7's im2col
    out = run_deconv(out, dp[6])                       # (B,64,64,128), 1 real channel
    out = out[..., :1]
    return jnp.transpose(out, (0, 3, 1, 2)).astype(jnp.float32)      # back to NCHW (B,1,H,W)


if __name__ == "__main__":
    B, H, W = 2, 64, 64
    key = jax.random.PRNGKey(0)
    img = jax.random.normal(key, (B, 3, H, W), dtype=jnp.float32)
    rp, dp = build_params(seed=0)
    out = extract_net_forward(img, rp, dp)
    out = jax.block_until_ready(out)
    assert out.shape == (B, 1, H, W), out.shape
    assert bool(jnp.all(jnp.isfinite(out)))
    print("KERNEL_OK")
</pallas_src>

<mosaic_0001>
module attributes {stable_mosaic.version = 11 : i64} {
  func.func @_mm1_kernel(%arg0: i32, %arg1: i32, %arg2: memref<512x256xbf16, #tpu.memory_space<vmem>>, %arg3: memref<256x128xbf16, #tpu.memory_space<vmem>>, %arg4: memref<1x128xf32, #tpu.memory_space<vmem>>, %arg5: memref<1x128xf32, #tpu.memory_space<vmem>>, %arg6: memref<512x128xbf16, #tpu.memory_space<vmem>>) attributes {dimension_semantics = [#tpu.dimension_semantics<parallel>, #tpu.dimension_semantics<parallel>], iteration_bounds = array<i64: 4, 1>, scalar_prefetch = 0 : i64, scratch_operands = 0 : i64, tpu.core_type = #tpu.core_type<tc>, window_params = [{transform_indices = @transform_0, window_bounds = array<i64: 512, 256>}, {transform_indices = @transform_1, window_bounds = array<i64: 256, 128>}, {transform_indices = @transform_2, window_bounds = array<i64: 1, 128>}, {transform_indices = @transform_3, window_bounds = array<i64: 1, 128>}, {transform_indices = @transform_4, window_bounds = array<i64: 512, 128>}]} {
    %c0 = arith.constant 0 : index
    %c0_0 = arith.constant 0 : index
    %0 = vector.load %arg2[%c0, %c0_0] : memref<512x256xbf16, #tpu.memory_space<vmem>>, vector<512x256xbf16>
    %c0_1 = arith.constant 0 : index
    %c0_2 = arith.constant 0 : index
    %1 = vector.load %arg3[%c0_1, %c0_2] : memref<256x128xbf16, #tpu.memory_space<vmem>>, vector<256x128xbf16>
    %cst = arith.constant dense<0.000000e+00> : vector<512x128xf32>
    %2 = tpu.matmul %0, %1, %cst {dimension_numbers = #tpu.dot_dimension_numbers<[1], [0], [0], [1], [0, 0, 1, 1], [], []>} : vector<512x256xbf16>, vector<256x128xbf16>, vector<512x128xf32> -> vector<512x128xf32>
    %c0_3 = arith.constant 0 : index
    %c0_4 = arith.constant 0 : index
    %3 = vector.load %arg4[%c0_3, %c0_4] : memref<1x128xf32, #tpu.memory_space<vmem>>, vector<1x128xf32>
    %c0_5 = arith.constant 0 : index
    %c0_6 = arith.constant 0 : index
    %4 = vector.load %arg5[%c0_5, %c0_6] : memref<1x128xf32, #tpu.memory_space<vmem>>, vector<1x128xf32>
    %5 = vector.broadcast %3 : vector<1x128xf32> to vector<512x128xf32>
    %6 = arith.mulf %2, %5 : vector<512x128xf32>
    %7 = vector.broadcast %4 : vector<1x128xf32> to vector<512x128xf32>
    %8 = arith.addf %6, %7 : vector<512x128xf32>
    %9 = arith.truncf %8 : vector<512x128xf32> to vector<512x128xbf16>
    %c0_7 = arith.constant 0 : index
    %c0_8 = arith.constant 0 : index
    %10 = vector.load %arg6[%c0_7, %c0_8] : memref<512x128xbf16, #tpu.memory_space<vmem>>, vector<512x128xbf16>
    tpu.vector_store %arg6[%c0_7, %c0_8], %9 {strides = array<i32>} : memref<512x128xbf16, #tpu.memory_space<vmem>>, vector<512x128xbf16>,
    return
  }
  func.func @transform_0(%arg0: i32, %arg1: i32) -> (i32, i32) {
    %c0_i32 = arith.constant 0 : i32
    %c0_i32_0 = arith.constant 0 : i32
    return %arg0, %c0_i32 : i32, i32
  }
  func.func @transform_1(%arg0: i32, %arg1: i32) -> (i32, i32) {
    %c0_i32 = arith.constant 0 : i32
    %c0_i32_0 = arith.constant 0 : i32
    return %c0_i32, %arg1 : i32, i32
  }
  func.func @transform_2(%arg0: i32, %arg1: i32) -> (i32, i32) {
    %c0_i32 = arith.constant 0 : i32
    %c0_i32_0 = arith.constant 0 : i32
    return %c0_i32, %arg1 : i32, i32
  }
  func.func @transform_3(%arg0: i32, %arg1: i32) -> (i32, i32) {
    %c0_i32 = arith.constant 0 : i32
    %c0_i32_0 = arith.constant 0 : i32
    return %c0_i32, %arg1 : i32, i32
  }
  func.func @transform_4(%arg0: i32, %arg1: i32) -> (i32, i32) {
    %c0_i32 = arith.constant 0 : i32
    return %arg0, %arg1 : i32, i32
  }
}

</mosaic_0001>

<llo_original>
// kernel: tpu_custom_call.1
$region0: #{tpu_custom_call.1}
  #allocation0 [shape = 'u32[]', space=smem, size = 0x4, offset = 0x4, fixed_abs, tag = 'smem constant byte address 0x4 - core index']
  #allocation1 [shape = 'u32[72,128]{1,0:T(1,128)}', space=vmem, size = 0x9000, scoped, tag = 'internal scratch']
  %s0 = inlined_call_operand.hbm [shape: bf16[2048,256], index: 0, kind: input, shape index: {}]
  %s1 = inlined_call_operand.hbm [shape: bf16[256,128], index: 1, kind: input, shape index: {}]
  %s2 = inlined_call_operand.vmem [shape: f32[1,128], index: 2, kind: input, shape index: {}]
  %s3 = inlined_call_operand.vmem [shape: f32[1,128], index: 3, kind: input, shape index: {}]
  %s4 = inlined_call_operand.hbm [shape: bf16[2048,128], index: 4, kind: output, shape index: {}]
  %s5 = sld [smem:[#allocation0]]
  $region57: #{tpu_custom_call.1} parent=0
    _
  %s7 = ssub.s32 1, %s5
  %s8 = scalar_select 0, %s7, %s5
  $region1: #{tpu_custom_call.1} parent=0
    #allocation2 [shape = 'u8[524288]{0}', space=vmem, size = 0x80000, scoped, tag = 'input window, operand 0']
    #allocation3 [shape = 's32[2]{0}', space=sflag, size = 0x8, scoped, tag = 'scoped memory for tpu_custom_call.1']
    #allocation4 [shape = 's32[2]{0}', space=sflag, size = 0x8, scoped, tag = 'scoped memory for tpu_custom_call.1']
    #allocation5 [shape = 'u8[65536]{0}', space=vmem, size = 0x10000, scoped, tag = 'input window, operand 1, single buffered']
    #allocation6 [shape = 's32[1]{0}', space=sflag, size = 0x4, scoped, tag = 'scoped memory for tpu_custom_call.1']
    #allocation7 [shape = 'u8[262144]{0}', space=vmem, size = 0x40000, scoped, tag = 'output window, operand 0']
    %9 = vsyncpa [#allocation3], 0
    %s10 = scalar_lea.sflag [#allocation3], 1
    %11 = vsyncpa %s10, 0
    %12 = vsyncpa [#allocation6], 0
    %13 = vsyncpa [#allocation4], 0
    %s14 = scalar_lea.sflag [#allocation4], 1
    %15 = vsyncpa %s14, 0
    loop: start=0, step=1, limit=6
    $region2: #{tpu_custom_call.1} parent=1 // loop_pre_header
      _
    $region3: #{tpu_custom_call.1} parent=1 // loop_header
      %s17 = sphi 0, %s21
      %p18 = scmp.ge.s32.totalorder %s17, 6
      %s24 = sphi 0, %s36
      %s25 = sphi 0, %s32
      %s26 = sphi 0, %s24
      %s27 = sphi 0, %s25
      %s28 = sphi 0, %s26
      %s29 = sphi 0, %s27
      %s39 = sphi 0, %s41
      %s42 = sphi 0, %s39
      %s43 = sphi 0, %s42
      %s59 = sphi 0, %s43
      %s65 = sphi 0, %s67
      %s68 = sphi 0, %s65
      %s69 = sphi 0, %s68
      %s85 = sphi 0, %s69
      %s91 = sphi 0, %s93
      %s94 = sphi 0, %s91
      %s95 = sphi 0, %s94
      %s111 = sphi 0, %s95
      %s117 = sphi 0, %s119
      %s120 = sphi 0, %s117
      %s121 = sphi 0, %s120
      %s137 = sphi 0, %s121
      %s145 = sphi 0, %s147
      %s148 = sphi 0, %s145
      %s149 = sphi 0, %s148
      %s165 = sphi 0, %s149
    $region4: #{tpu_custom_call.1} parent=1 // loop_header_branch
      %20 = sbr.rel (%p18) target = $region8
    $region5: #{tpu_custom_call.1} parent=1 // loop_body
      %s22 = ssub.s32 %s17, 1
      %s23 = ssub.s32 %s17, 2
      %s30 = sadd.s32 1, %s25
      %p31 = scmp.ge.s32.totalorder %s30, 1
      %s32 = scalar_select %p31, 0, %s30
      %s33 = sadd.s32 1, %s24
      %s34 = scalar_select %p31, %s33, %s24
      %p35 = scmp.ge.s32.totalorder %s34, 4
      %s36 = scalar_select %p35, 0, %s34
      %s37 = ssub.s32 %s24, %s36
      %p38 = scmp.eq.s32.totalorder %s37, 0
      %s40 = sadd.s32 %s39, 1
      %s41 = scalar_select %p38, %s39, %s40
      %p44 = pneg %p38
      %p45 = scmp.eq.s32.totalorder %s17, 3
      %p46 = por %p44, %p45
      %p47 = scmp.ne.s32.totalorder %s39, %s42
      %p48 = scmp.eq.s32.totalorder %s17, 0
      %p49 = por %p47, %p48
      %p50 = scmp.ne.s32.totalorder %s39, %s42
      %p51 = scmp.eq.s32.totalorder %s22, 3
      %p52 = por %p50, %p51
      %p53 = scmp.ne.s32.totalorder %s42, %s43
      %p54 = scmp.eq.s32.totalorder %s22, 0
      %p55 = por %p53, %p54
      %p56 = scmp.ne.s32.totalorder %s42, %s43
      %p57 = scmp.eq.s32.totalorder %s23, 3
      %p58 = por %p56, %p57
      %p60 = scmp.ne.s32.totalorder %s43, %s59
      %p61 = scmp.eq.s32.totalorder %s23, 0
      %p62 = por %p60, %p61
      %s63 = ssub.s32 %s25, %s32
      %p64 = scmp.eq.s32.totalorder %s63, 0
      %s66 = sadd.s32 %s65, 1
      %s67 = scalar_select %p64, %s65, %s66
      %p70 = pneg %p64
      %p71 = scmp.eq.s32.totalorder %s17, 3
      %p72 = por %p70, %p71
      %p73 = scmp.ne.s32.totalorder %s65, %s68
      %p74 = scmp.eq.s32.totalorder %s17, 0
      %p75 = por %p73, %p74
      %p76 = scmp.ne.s32.totalorder %s65, %s68
      %p77 = scmp.eq.s32.totalorder %s22, 3
      %p78 = por %p76, %p77
      %p79 = scmp.ne.s32.totalorder %s68, %s69
      %p80 = scmp.eq.s32.totalorder %s22, 0
      %p81 = por %p79, %p80
      %p82 = scmp.ne.s32.totalorder %s68, %s69
      %p83 = scmp.eq.s32.totalorder %s23, 3
      %p84 = por %p82, %p83
      %p86 = scmp.ne.s32.totalorder %s69, %s85
      %p87 = scmp.eq.s32.totalorder %s23, 0
      %p88 = por %p86, %p87
      %s89 = ssub.s32 %s25, %s32
      %p90 = scmp.eq.s32.totalorder %s89, 0
      %s92 = sadd.s32 %s91, 1
      %s93 = scalar_select %p90, %s91, %s92
      %p96 = pneg %p90
      %p97 = scmp.eq.s32.totalorder %s17, 3
      %p98 = por %p96, %p97
      %p99 = scmp.ne.s32.totalorder %s91, %s94
      %p100 = scmp.eq.s32.totalorder %s17, 0
      %p101 = por %p99, %p100
      %p102 = scmp.ne.s32.totalorder %s91, %s94
      %p103 = scmp.eq.s32.totalorder %s22, 3
      %p104 = por %p102, %p103
      %p105 = scmp.ne.s32.totalorder %s94, %s95
      %p106 = scmp.eq.s32.totalorder %s22, 0
      %p107 = por %p105, %p106
      %p108 = scmp.ne.s32.totalorder %s94, %s95
      %p109 = scmp.eq.s32.totalorder %s23, 3
      %p110 = por %p108, %p109
      %p112 = scmp.ne.s32.totalorder %s95, %s111
      %p113 = scmp.eq.s32.totalorder %s23, 0
      %p114 = por %p112, %p113
      %s115 = ssub.s32 %s25, %s32
      %p116 = scmp.eq.s32.totalorder %s115, 0
      %s118 = sadd.s32 %s117, 1
      %s119 = scalar_select %p116, %s117, %s118
      %p122 = pneg %p116
      %p123 = scmp.eq.s32.totalorder %s17, 3
      %p124 = por %p122, %p123
      %p125 = scmp.ne.s32.totalorder %s117, %s120
      %p126 = scmp.eq.s32.totalorder %s17, 0
      %p127 = por %p125, %p126
      %p128 = scmp.ne.s32.totalorder %s117, %s120
      %p129 = scmp.eq.s32.totalorder %s22, 3
      %p130 = por %p128, %p129
      %p131 = scmp.ne.s32.totalorder %s120, %s121
      %p132 = scmp.eq.s32.totalorder %s22, 0
      %p133 = por %p131, %p132
      %p134 = scmp.ne.s32.totalorder %s120, %s121
      %p135 = scmp.eq.s32.totalorder %s23, 3
      %p136 = por %p134, %p135
      %p138 = scmp.ne.s32.totalorder %s121, %s137
      %p139 = scmp.eq.s32.totalorder %s23, 0
      %p140 = por %p138, %p139
      %s141 = ssub.s32 %s24, %s36
      %s142 = ssub.s32 %s25, %s32
      %s143 = sor.u32 %s141, %s142
      %p144 = scmp.eq.s32.totalorder %s143, 0
      %s146 = sadd.s32 %s145, 1
      %s147 = scalar_select %p144, %s145, %s146
      %p150 = pneg %p144
      %p151 = scmp.eq.s32.totalorder %s17, 3
      %p152 = por %p150, %p151
      %p153 = scmp.ne.s32.totalorder %s145, %s148
      %p154 = scmp.eq.s32.totalorder %s17, 0
      %p155 = por %p153, %p154
      %p156 = scmp.ne.s32.totalorder %s145, %s148
      %p157 = scmp.eq.s32.totalorder %s22, 3
      %p158 = por %p156, %p157
      %p159 = scmp.ne.s32.totalorder %s148, %s149
      %p160 = scmp.eq.s32.totalorder %s22, 0
      %p161 = por %p159, %p160
      %p162 = scmp.ne.s32.totalorder %s148, %s149
      %p163 = scmp.eq.s32.totalorder %s23, 3
      %p164 = por %p162, %p163
      %p166 = scmp.ne.s32.totalorder %s149, %s165
      %p167 = scmp.eq.s32.totalorder %s23, 0
      %p168 = por %p166, %p167
      %p169 = scmp.le.s32.totalorder 1, %s17
      %p170 = scmp.lt.s32.totalorder %s17, 5
      %p171 = pnand %p169, %p170
      %p172 = pneg %p171
      // Predicated region
      $region9: #{tpu_custom_call.1} parent=5 // pred_check
        _
      $region10: #{tpu_custom_call.1} parent=5 // pred_check_branch
        %174 = sbr.rel (%p171) target = $region12
      $region11: #{tpu_custom_call.1} parent=5 // pred_region
        %s175 = ssub.s32 %s17, 1
        // Predicated region
        $region13: #{tpu_custom_call.1} parent=11 // pred_check
          %p176 = pneg %p81
        $region14: #{tpu_custom_call.1} parent=11 // pred_check_branch
          %178 = sbr.rel (%p176) target = $region16
        $region15: #{tpu_custom_call.1} parent=11 // pred_region
          %180 = vsyncadd [#allocation6], 0
          %s181 = smul.addr %s27, 4
          %s182 = scalar_lea.hbm %s1, %s181
          %s183 = sshll.u32 %s182, 4
          %s184 = int_to_ptr.hbm [resolvable:$true] %s183
          %s185 = sshll.u32 [#allocation5], 4
          %s186 = int_to_ptr.vmem [resolvable:$true] %s185
          %191 = dma.hbm_to_vmem [thread:$0]  %s184, 2048, %s186, [#allocation6], 64, 64, 4
        $region16: #{tpu_custom_call.1} parent=11 // pred_fallthru
          _
        // Predicated region
        $region17: #{tpu_custom_call.1} parent=11 // pred_check
          %p192 = pneg %p107
        $region18: #{tpu_custom_call.1} parent=11 // pred_check_branch
          %194 = sbr.rel (%p192) target = $region20
        $region19: #{tpu_custom_call.1} parent=11 // pred_region
          %p195 = scmp.lt.s32.totalorder %s27, 0
          %s196 = scalar_select %p195, %s27, 0
          %s197 = scalar_lea.vmem %s2, %s196
        $region20: #{tpu_custom_call.1} parent=11 // pred_fallthru
          _
        // Predicated region
        $region21: #{tpu_custom_call.1} parent=11 // pred_check
          %p198 = pneg %p133
        $region22: #{tpu_custom_call.1} parent=11 // pred_check_branch
          %200 = sbr.rel (%p198) target = $region24
        $region23: #{tpu_custom_call.1} parent=11 // pred_region
          %p201 = scmp.lt.s32.totalorder %s27, 0
          %s202 = scalar_select %p201, %s27, 0
          %s203 = scalar_lea.vmem %s3, %s202
        $region24: #{tpu_custom_call.1} parent=11 // pred_fallthru
          _
      $region12: #{tpu_custom_call.1} parent=5 // pred_fallthru
        _
      %p204 = scmp.lt.s32.totalorder %s17, 4
      // Predicated region
      $region25: #{tpu_custom_call.1} parent=5 // pred_check
        %p205 = pneg %p204
      $region26: #{tpu_custom_call.1} parent=5 // pred_check_branch
        %207 = sbr.rel (%p205) target = $region28
      $region27: #{tpu_custom_call.1} parent=5 // pred_region
        // Predicated region
        $region29: #{tpu_custom_call.1} parent=27 // pred_check
          %p208 = pneg %p49
        $region30: #{tpu_custom_call.1} parent=27 // pred_check_branch
          %210 = sbr.rel (%p208) target = $region32
        $region31: #{tpu_custom_call.1} parent=27 // pred_region
          %s211 = sand.u32 %s39, 1
          %s212 = scalar_lea.sflag [#allocation3], %s211
          %s213 = sand.u32 %s39, 1
          %s214 = smul.addr %s213, 512
          %s215 = scalar_lea.vmem [#allocation2], %s214
          %s216 = smul.u32 64, %s24
          %218 = vsyncadd %s212, 0
          %s219 = smul.addr %s216, 2
          %s220 = smul.addr %s219, 4
          %s221 = scalar_lea.hbm %s0, %s220
          %s222 = sshll.u32 %s221, 4
          %s223 = int_to_ptr.hbm [resolvable:$true] %s222
          %s224 = sshll.u32 %s215, 4
          %s225 = int_to_ptr.vmem [resolvable:$true] %s224
          %230 = dma.hbm_to_vmem [thread:$0]  %s223, 8192, %s225, %s212, 128, 128, 8
        $region32: #{tpu_custom_call.1} parent=27 // pred_fallthru
          _
      $region28: #{tpu_custom_call.1} parent=5 // pred_fallthru
        _
      %p231 = scmp.le.s32.totalorder 1, %s17
      %p232 = scmp.lt.s32.totalorder %s17, 5
      %p233 = pnand %p231, %p232
      %p234 = pneg %p233
      // Predicated region
      $region33: #{tpu_custom_call.1} parent=5 // pred_check
        _
      $region34: #{tpu_custom_call.1} parent=5 // pred_check_branch
        %236 = sbr.rel (%p233) target = $region36
      $region35: #{tpu_custom_call.1} parent=5 // pred_region
        %s237 = ssub.s32 %s17, 1
        %s238 = sand.u32 %s42, 1
        %s239 = scalar_lea.sflag [#allocation3], %s238
        %s240 = sand.u32 %s42, 1
        %s241 = smul.addr %s240, 512
        %s242 = scalar_lea.vmem [#allocation2], %s241
        // Predicated region
        $region37: #{tpu_custom_call.1} parent=35 // pred_check
          %p243 = pneg %p55
        $region38: #{tpu_custom_call.1} parent=35 // pred_check_branch
          %245 = sbr.rel (%p243) target = $region40
        $region39: #{tpu_custom_call.1} parent=35 // pred_region
          %247 = dma.done %s239, 8192
        $region40: #{tpu_custom_call.1} parent=35 // pred_fallthru
          _
        // Predicated region
        $region41: #{tpu_custom_call.1} parent=35 // pred_check
          %p248 = pneg %p81
        $region42: #{tpu_custom_call.1} parent=35 // pred_check_branch
          %250 = sbr.rel (%p248) target = $region44
        $region43: #{tpu_custom_call.1} parent=35 // pred_region
          %252 = dma.done [#allocation6], 2048
        $region44: #{tpu_custom_call.1} parent=35 // pred_fallthru
          _
        %s253 = sand.u32 %s42, 1
        %s254 = scalar_lea.sflag [#allocation3], %s253
        %s255 = sand.u32 %s42, 1
        %s256 = smul.addr %s255, 512
        %s257 = scalar_lea.vmem [#allocation2], %s256
        %p258 = pneg %p55
        %p259 = pneg %p52
        %p260 = pneg %p81
        %p261 = pneg %p78
        %p262 = scmp.lt.s32.totalorder %s27, 0
        %s263 = scalar_select %p262, %s27, 0
        %s264 = scalar_lea.vmem %s2, %s263
        %p265 = pneg %p107
        %p266 = pneg %p104
        %p267 = scmp.lt.s32.totalorder %s27, 0
        %s268 = scalar_select %p267, %s27, 0
        %s269 = scalar_lea.vmem %s3, %s268
        %p270 = pneg %p133
        %p271 = pneg %p130
        %p272 = pneg %p161
        %p273 = pneg %p158
        %s274 = sand.u32 %s148, 1
        %s275 = scalar_lea.sflag [#allocation4], %s274
        %s276 = sand.u32 %s148, 1
        %s277 = smul.addr %s276, 256
        %s278 = scalar_lea.vmem [#allocation7], %s277
        %s279 = smul.u32 64, %s26
        %p280 = scmp.lt.s32.totalorder %s27, 0
        %s281 = scalar_select %p280, %s27, 0
        %s282 = scalar_lea.vmem %s2, %s281
        %p283 = scmp.lt.s32.totalorder %s27, 0
        %s284 = scalar_select %p283, %s27, 0
        %s285 = scalar_lea.vmem %s3, %s284
        %s286 = smul.u32 64, %s26
        %v287 = vld [vmem:[%s242] sm:$0xff]
        %v288 = vld [vmem:[%s242 + $0x8] sm:$0xff]
        %v289 = vld [vmem:[%s242 + $0x10] sm:$0xff]
        %v290 = vld [vmem:[%s242 + $0x18] sm:$0xff]
        %v291 = vld [vmem:[%s242 + $0x20] sm:$0xff]
        %v292 = vld [vmem:[%s242 + $0x28] sm:$0xff]
        %v293 = vld [vmem:[%s242 + $0x30] sm:$0xff]
        %v294 = vld [vmem:[%s242 + $0x38] sm:$0xff]
        %v295 = vld [vmem:[%s242 + $0x40] sm:$0xff]
        %v296 = vld [vmem:[%s242 + $0x48] sm:$0xff]
        %v297 = vld [vmem:[%s242 + $0x50] sm:$0xff]
        %v298 = vld [vmem:[%s242 + $0x58] sm:$0xff]
        %v299 = vld [vmem:[%s242 + $0x60] sm:$0xff]
        %v300 = vld [vmem:[%s242 + $0x68] sm:$0xff]
        %v301 = vld [vmem:[%s242 + $0x70] sm:$0xff]
        %v302 = vld [vmem:[%s242 + $0x78] sm:$0xff]
        %v303 = vld [vmem:[%s242 + $0x80] sm:$0xff]
        %v304 = vld [vmem:[%s242 + $0x88] sm:$0xff]
        %v305 = vld [vmem:[%s242 + $0x90] sm:$0xff]
        %v306 = vld [vmem:[%s242 + $0x98] sm:$0xff]
        %v307 = vld [vmem:[%s242 + $0xa0] sm:$0xff]
        %v308 = vld [vmem:[%s242 + $0xa8] sm:$0xff]
        %v309 = vld [vmem:[%s242 + $0xb0] sm:$0xff]
        %v310 = vld [vmem:[%s242 + $0xb8] sm:$0xff]
        %v311 = vld [vmem:[%s242 + $0xc0] sm:$0xff]
        %v312 = vld [vmem:[%s242 + $0xc8] sm:$0xff]
        %v313 = vld [vmem:[%s242 + $0xd0] sm:$0xff]
        %v314 = vld [vmem:[%s242 + $0xd8] sm:$0xff]
        %v315 = vld [vmem:[%s242 + $0xe0] sm:$0xff]
        %v316 = vld [vmem:[%s242 + $0xe8] sm:$0xff]
        %v317 = vld [vmem:[%s242 + $0xf0] sm:$0xff]
        %v318 = vld [vmem:[%s242 + $0xf8] sm:$0xff]
        %v319 = vld [vmem:[%s242 + $0x100] sm:$0xff]
        %v320 = vld [vmem:[%s242 + $0x108] sm:$0xff]
        %v321 = vld [vmem:[%s242 + $0x110] sm:$0xff]
        %v322 = vld [vmem:[%s242 + $0x118] sm:$0xff]
        %v323 = vld [vmem:[%s242 + $0x120] sm:$0xff]
        %v324 = vld [vmem:[%s242 + $0x128] sm:$0xff]
        %v325 = vld [vmem:[%s242 + $0x130] sm:$0xff]
        %v326 = vld [vmem:[%s242 + $0x138] sm:$0xff]
        %v327 = vld [vmem:[%s242 + $0x140] sm:$0xff]
        %v328 = vld [vmem:[%s242 + $0x148] sm:$0xff]
        %v329 = vld [vmem:[%s242 + $0x150] sm:$0xff]
        %v330 = vld [vmem:[%s242 + $0x158] sm:$0xff]
        %v331 = vld [vmem:[%s242 + $0x160] sm:$0xff]
        %v332 = vld [vmem:[%s242 + $0x168] sm:$0xff]
        %v333 = vld [vmem:[%s242 + $0x170] sm:$0xff]
        %v334 = vld [vmem:[%s242 + $0x178] sm:$0xff]
        %v335 = vld [vmem:[%s242 + $0x180] sm:$0xff]
        %v336 = vld [vmem:[%s242 + $0x188] sm:$0xff]
        %v337 = vld [vmem:[%s242 + $0x190] sm:$0xff]
        %v338 = vld [vmem:[%s242 + $0x198] sm:$0xff]
        %v339 = vld [vmem:[%s242 + $0x1a0] sm:$0xff]
        %v340 = vld [vmem:[%s242 + $0x1a8] sm:$0xff]
        %v341 = vld [vmem:[%s242 + $0x1b0] sm:$0xff]
        %v342 = vld [vmem:[%s242 + $0x1b8] sm:$0xff]
        %v343 = vld [vmem:[%s242 + $0x1c0] sm:$0xff]
        %v344 = vld [vmem:[%s242 + $0x1c8] sm:$0xff]
        %v345 = vld [vmem:[%s242 + $0x1d0] sm:$0xff]
        %v346 = vld [vmem:[%s242 + $0x1d8] sm:$0xff]
        %v347 = vld [vmem:[%s242 + $0x1e0] sm:$0xff]
        %v348 = vld [vmem:[%s242 + $0x1e8] sm:$0xff]
        %v349 = vld [vmem:[%s242 + $0x1f0] sm:$0xff]
        %v350 = vld [vmem:[%s242 + $0x1f8] sm:$0xff]
        %v351 = vld [vmem:[#allocation5] sm:$0xf]
        %v352 = vld [vmem:[#allocation5 + $0x4] sm:$0xf]
        %v353 = vld [vmem:[#allocation5 + $0x8] sm:$0xf]
        %v354 = vld [vmem:[#allocation5 + $0xc] sm:$0xf]
        %v355 = vld [vmem:[#allocation5 + $0x10] sm:$0xf]
        %v356 = vld [vmem:[#allocation5 + $0x14] sm:$0xf]
        %v357 = vld [vmem:[#allocation5 + $0x18] sm:$0xf]
        %v358 = vld [vmem:[#allocation5 + $0x1c] sm:$0xf]
        %v359 = vld [vmem:[#allocation5 + $0x20] sm:$0xf]
        %v360 = vld [vmem:[#allocation5 + $0x24] sm:$0xf]
        %v361 = vld [vmem:[#allocation5 + $0x28] sm:$0xf]
        %v362 = vld [vmem:[#allocation5 + $0x2c] sm:$0xf]
        %v363 = vld [vmem:[#allocation5 + $0x30] sm:$0xf]
        %v364 = vld [vmem:[#allocation5 + $0x34] sm:$0xf]
        %v365 = vld [vmem:[#allocation5 + $0x38] sm:$0xf]
        %v366 = vld [vmem:[#allocation5 + $0x3c] sm:$0xf]
        %v367 = vld [vmem:[#allocation5 + $0x40] sm:$0xf]
        %v368 = vld [vmem:[#allocation5 + $0x44] sm:$0xf]
        %v369 = vld [vmem:[#allocation5 + $0x48] sm:$0xf]
        %v370 = vld [vmem:[#allocation5 + $0x4c] sm:$0xf]
        %v371 = vld [vmem:[#allocation5 + $0x50] sm:$0xf]
        %v372 = vld [vmem:[#allocation5 + $0x54] sm:$0xf]
        %v373 = vld [vmem:[#allocation5 + $0x58] sm:$0xf]
        %v374 = vld [vmem:[#allocation5 + $0x5c] sm:$0xf]
        %v375 = vld [vmem:[#allocation5 + $0x60] sm:$0xf]
        %v376 = vld [vmem:[#allocation5 + $0x64] sm:$0xf]
        %v377 = vld [vmem:[#allocation5 + $0x68] sm:$0xf]
        %v378 = vld [vmem:[#allocation5 + $0x6c] sm:$0xf]
        %v379 = vld [vmem:[#allocation5 + $0x70] sm:$0xf]
        %v380 = vld [vmem:[#allocation5 + $0x74] sm:$0xf]
        %v381 = vld [vmem:[#allocation5 + $0x78] sm:$0xf]
        %v382 = vld [vmem:[#allocation5 + $0x7c] sm:$0xf]
        %v447 = vunpack.c.l.b16 %v287
        %v448 = vunpack.c.h.b16 %v287
        %v449 = vunpack.c.l.b16 %v288
        %v450 = vunpack.c.h.b16 %v288
        %v451 = vunpack.c.l.b16 %v289
        %v452 = vunpack.c.h.b16 %v289
        %v453 = vunpack.c.l.b16 %v290
        %v454 = vunpack.c.h.b16 %v290
        %v455 = vunpack.c.l.b16 %v291
        %v456 = vunpack.c.h.b16 %v291
        %v457 = vunpack.c.l.b16 %v292
        %v458 = vunpack.c.h.b16 %v292
        %v459 = vunpack.c.l.b16 %v293
        %v460 = vunpack.c.h.b16 %v293
        %v461 = vunpack.c.l.b16 %v294
        %v462 = vunpack.c.h.b16 %v294
        %v463 = vunpack.c.l.b16 %v295
        %v464 = vunpack.c.h.b16 %v295
        %v465 = vunpack.c.l.b16 %v296
        %v466 = vunpack.c.h.b16 %v296
        %v467 = vunpack.c.l.b16 %v297
        %v468 = vunpack.c.h.b16 %v297
        %v469 = vunpack.c.l.b16 %v298
        %v470 = vunpack.c.h.b16 %v298
        %v471 = vunpack.c.l.b16 %v299
        %v472 = vunpack.c.h.b16 %v299
        %v473 = vunpack.c.l.b16 %v300
        %v474 = vunpack.c.h.b16 %v300
        %v475 = vunpack.c.l.b16 %v301
        %v476 = vunpack.c.h.b16 %v301
        %v477 = vunpack.c.l.b16 %v302
        %v478 = vunpack.c.h.b16 %v302
        %v479 = vunpack.c.l.b16 %v303
        %v480 = vunpack.c.h.b16 %v303
        %v481 = vunpack.c.l.b16 %v304
        %v482 = vunpack.c.h.b16 %v304
        %v483 = vunpack.c.l.b16 %v305
        %v484 = vunpack.c.h.b16 %v305
        %v485 = vunpack.c.l.b16 %v306
        %v486 = vunpack.c.h.b16 %v306
        %v487 = vunpack.c.l.b16 %v307
        %v488 = vunpack.c.h.b16 %v307
        %v489 = vunpack.c.l.b16 %v308
        %v490 = vunpack.c.h.b16 %v308
        %v491 = vunpack.c.l.b16 %v309
        %v492 = vunpack.c.h.b16 %v309
        %v493 = vunpack.c.l.b16 %v310
        %v494 = vunpack.c.h.b16 %v310
        %v495 = vunpack.c.l.b16 %v311
        %v496 = vunpack.c.h.b16 %v311
        %v497 = vunpack.c.l.b16 %v312
        %v498 = vunpack.c.h.b16 %v312
        %v499 = vunpack.c.l.b16 %v313
        %v500 = vunpack.c.h.b16 %v313
        %v501 = vunpack.c.l.b16 %v314
        %v502 = vunpack.c.h.b16 %v314
        %v503 = vunpack.c.l.b16 %v315
        %v504 = vunpack.c.h.b16 %v315
        %v505 = vunpack.c.l.b16 %v316
        %v506 = vunpack.c.h.b16 %v316
        %v507 = vunpack.c.l.b16 %v317
        %v508 = vunpack.c.h.b16 %v317
        %v509 = vunpack.c.l.b16 %v318
        %v510 = vunpack.c.h.b16 %v318
        %v511 = vunpack.c.l.b16 %v319
        %v512 = vunpack.c.h.b16 %v319
        %v513 = vunpack.c.l.b16 %v320
        %v514 = vunpack.c.h.b16 %v320
        %v515 = vunpack.c.l.b16 %v321
        %v516 = vunpack.c.h.b16 %v321
        %v517 = vunpack.c.l.b16 %v322
        %v518 = vunpack.c.h.b16 %v322
        %v519 = vunpack.c.l.b16 %v323
        %v520 = vunpack.c.h.b16 %v323
        %v521 = vunpack.c.l.b16 %v324
        %v522 = vunpack.c.h.b16 %v324
        %v523 = vunpack.c.l.b16 %v325
        %v524 = vunpack.c.h.b16 %v325
        %v525 = vunpack.c.l.b16 %v326
        %v526 = vunpack.c.h.b16 %v326
        %v527 = vunpack.c.l.b16 %v327
        %v528 = vunpack.c.h.b16 %v327
        %v529 = vunpack.c.l.b16 %v328
        %v530 = vunpack.c.h.b16 %v328
        %v531 = vunpack.c.l.b16 %v329
        %v532 = vunpack.c.h.b16 %v329
        %v533 = vunpack.c.l.b16 %v330
        %v534 = vunpack.c.h.b16 %v330
        %v535 = vunpack.c.l.b16 %v331
        %v536 = vunpack.c.h.b16 %v331
        %v537 = vunpack.c.l.b16 %v332
        %v538 = vunpack.c.h.b16 %v332
        %v539 = vunpack.c.l.b16 %v333
        %v540 = vunpack.c.h.b16 %v333
        %v541 = vunpack.c.l.b16 %v334
        %v542 = vunpack.c.h.b16 %v334
        %v543 = vunpack.c.l.b16 %v335
        %v544 = vunpack.c.h.b16 %v335
        %v545 = vunpack.c.l.b16 %v336
        %v546 = vunpack.c.h.b16 %v336
        %v547 = vunpack.c.l.b16 %v337
        %v548 = vunpack.c.h.b16 %v337
        %v549 = vunpack.c.l.b16 %v338
        %v550 = vunpack.c.h.b16 %v338
        %v551 = vunpack.c.l.b16 %v339
        %v552 = vunpack.c.h.b16 %v339
        %v553 = vunpack.c.l.b16 %v340
        %v554 = vunpack.c.h.b16 %v340
        %v555 = vunpack.c.l.b16 %v341
        %v556 = vunpack.c.h.b16 %v341
        %v557 = vunpack.c.l.b16 %v342
        %v558 = vunpack.c.h.b16 %v342
        %v559 = vunpack.c.l.b16 %v343
        %v560 = vunpack.c.h.b16 %v343
        %v561 = vunpack.c.l.b16 %v344
        %v562 = vunpack.c.h.b16 %v344
        %v563 = vunpack.c.l.b16 %v345
        %v564 = vunpack.c.h.b16 %v345
        %v565 = vunpack.c.l.b16 %v346
        %v566 = vunpack.c.h.b16 %v346
        %v567 = vunpack.c.l.b16 %v347
        %v568 = vunpack.c.h.b16 %v347
        %v569 = vunpack.c.l.b16 %v348
        %v570 = vunpack.c.h.b16 %v348
        %v571 = vunpack.c.l.b16 %v349
        %v572 = vunpack.c.h.b16 %v349
        %v573 = vunpack.c.l.b16 %v350
        %v574 = vunpack.c.h.b16 %v350
        %v575 = vpack.c.b16 %v449, %v447
        %v576 = vpack.c.b16 %v450, %v448
        %v577 = vpack.c.b16 %v453, %v451
        %v578 = vpack.c.b16 %v454, %v452
        %v579 = vpack.c.b16 %v457, %v455
        %v580 = vpack.c.b16 %v458, %v456
        %v581 = vpack.c.b16 %v461, %v459
        %v582 = vpack.c.b16 %v462, %v460
        %v583 = vpack.c.b16 %v465, %v463
        %v584 = vpack.c.b16 %v466, %v464
        %v585 = vpack.c.b16 %v469, %v467
        %v586 = vpack.c.b16 %v470, %v468
        %v587 = vpack.c.b16 %v473, %v471
        %v588 = vpack.c.b16 %v474, %v472
        %v589 = vpack.c.b16 %v477, %v475
        %v590 = vpack.c.b16 %v478, %v476
        %v591 = vpack.c.b16 %v481, %v479
        %v592 = vpack.c.b16 %v482, %v480
        %v593 = vpack.c.b16 %v485, %v483
        %v594 = vpack.c.b16 %v486, %v484
        %v595 = vpack.c.b16 %v489, %v487
        %v596 = vpack.c.b16 %v490, %v488
        %v597 = vpack.c.b16 %v493, %v491
        %v598 = vpack.c.b16 %v494, %v492
        %v599 = vpack.c.b16 %v497, %v495
        %v600 = vpack.c.b16 %v498, %v496
        %v601 = vpack.c.b16 %v501, %v499
        %v602 = vpack.c.b16 %v502, %v500
        %v603 = vpack.c.b16 %v505, %v503
        %v604 = vpack.c.b16 %v506, %v504
        %v605 = vpack.c.b16 %v509, %v507
        %v606 = vpack.c.b16 %v510, %v508
        %v607 = vpack.c.b16 %v513, %v511
        %v608 = vpack.c.b16 %v514, %v512
        %v609 = vpack.c.b16 %v517, %v515
        %v610 = vpack.c.b16 %v518, %v516
        %v611 = vpack.c.b16 %v521, %v519
        %v612 = vpack.c.b16 %v522, %v520
        %v613 = vpack.c.b16 %v525, %v523
        %v614 = vpack.c.b16 %v526, %v524
        %v615 = vpack.c.b16 %v529, %v527
        %v616 = vpack.c.b16 %v530, %v528
        %v617 = vpack.c.b16 %v533, %v531
        %v618 = vpack.c.b16 %v534, %v532
        %v619 = vpack.c.b16 %v537, %v535
        %v620 = vpack.c.b16 %v538, %v536
        %v621 = vpack.c.b16 %v541, %v539
        %v622 = vpack.c.b16 %v542, %v540
        %v623 = vpack.c.b16 %v545, %v543
        %v624 = vpack.c.b16 %v546, %v544
        %v625 = vpack.c.b16 %v549, %v547
        %v626 = vpack.c.b16 %v550, %v548
        %v627 = vpack.c.b16 %v553, %v551
        %v628 = vpack.c.b16 %v554, %v552
        %v629 = vpack.c.b16 %v557, %v555
        %v630 = vpack.c.b16 %v558, %v556
        %v631 = vpack.c.b16 %v561, %v559
        %v632 = vpack.c.b16 %v562, %v560
        %v633 = vpack.c.b16 %v565, %v563
        %v634 = vpack.c.b16 %v566, %v564
        %v635 = vpack.c.b16 %v569, %v567
        %v636 = vpack.c.b16 %v570, %v568
        %v637 = vpack.c.b16 %v573, %v571
        %v638 = vpack.c.b16 %v574, %v572
        %v735 = vunpack.c.l.b16 %v351
        %v736 = vunpack.c.l.b16 %v352
        %v737 = vunpack.c.l.b16 %v353
        %v738 = vunpack.c.l.b16 %v354
        %v739 = vunpack.c.l.b16 %v355
        %v740 = vunpack.c.l.b16 %v356
        %v741 = vunpack.c.l.b16 %v357
        %v742 = vunpack.c.l.b16 %v358
        %v743 = vunpack.c.l.b16 %v359
        %v744 = vunpack.c.l.b16 %v360
        %v745 = vunpack.c.l.b16 %v361
        %v746 = vunpack.c.l.b16 %v362
        %v747 = vunpack.c.l.b16 %v363
        %v748 = vunpack.c.l.b16 %v364
        %v749 = vunpack.c.l.b16 %v365
        %v750 = vunpack.c.l.b16 %v366
        %v751 = vunpack.c.l.b16 %v367
        %v752 = vunpack.c.l.b16 %v368
        %v753 = vunpack.c.l.b16 %v369
        %v754 = vunpack.c.l.b16 %v370
        %v755 = vunpack.c.l.b16 %v371
        %v756 = vunpack.c.l.b16 %v372
        %v757 = vunpack.c.l.b16 %v373
        %v758 = vunpack.c.l.b16 %v374
        %v759 = vunpack.c.l.b16 %v375
        %v760 = vunpack.c.l.b16 %v376
        %v761 = vunpack.c.l.b16 %v377
        %v762 = vunpack.c.l.b16 %v378
        %v763 = vunpack.c.l.b16 %v379
        %v764 = vunpack.c.l.b16 %v380
        %v765 = vunpack.c.l.b16 %v381
        %v766 = vunpack.c.l.b16 %v382
        %v767 = vpack.c.b16 %v736, %v735
        %v768 = vpack.c.b16 %v738, %v737
        %v769 = vpack.c.b16 %v740, %v739
        %v770 = vpack.c.b16 %v742, %v741
        %v771 = vpack.c.b16 %v744, %v743
        %v772 = vpack.c.b16 %v746, %v745
        %v773 = vpack.c.b16 %v748, %v747
        %v774 = vpack.c.b16 %v750, %v749
        %v775 = vpack.c.b16 %v752, %v751
        %v776 = vpack.c.b16 %v754, %v753
        %v777 = vpack.c.b16 %v756, %v755
        %v778 = vpack.c.b16 %v758, %v757
        %v779 = vpack.c.b16 %v760, %v759
        %v780 = vpack.c.b16 %v762, %v761
        %v781 = vpack.c.b16 %v764, %v763
        %v782 = vpack.c.b16 %v766, %v765
        %799 = vmatpush.bf16.msra.mxu0 %v774
        %800 = vmatpush.bf16.msra.mxu0 %v773
        %801 = vmatpush.bf16.msra.mxu0 %v772
        %802 = vmatpush.bf16.msra.mxu0 %v771
        %803 = vmatpush.bf16.msra.mxu0 %v770
        %804 = vmatpush.bf16.msra.mxu0 %v769
        %805 = vmatpush.bf16.msra.mxu0 %v768
        %806 = vmatpush.bf16.msra.mxu0 %v767
        %807 = vmatmul.bf16.gmra.mxu0 %v575
        %v808 = vpop.f32.mrf.mxu0
        %v809 = vadd.f32 0.0, %v808
        %v810 = vpop.f32.mrf.mxu0
        %v811 = vadd.f32 0.0, %v810
        %812 = vmatmul.bf16.gmra.mxu0 %v577
        %v813 = vpop.f32.mrf.mxu0
        %v814 = vadd.f32 0.0, %v813
        %v815 = vpop.f32.mrf.mxu0
        %v816 = vadd.f32 0.0, %v815
        %817 = vmatmul.bf16.gmra.mxu0 %v579
        %v818 = vpop.f32.mrf.mxu0
        %v819 = vadd.f32 0.0, %v818
        %v820 = vpop.f32.mrf.mxu0
        %v821 = vadd.f32 0.0, %v820
        %822 = vmatmul.bf16.gmra.mxu0 %v581
        %v823 = vpop.f32.mrf.mxu0
        %v824 = vadd.f32 0.0, %v823
        %v825 = vpop.f32.mrf.mxu0
        %v826 = vadd.f32 0.0, %v825
        %827 = vmatmul.bf16.gmra.mxu0 %v583
        %v828 = vpop.f32.mrf.mxu0
        %v829 = vadd.f32 0.0, %v828
        %v830 = vpop.f32.mrf.mxu0
        %v831 = vadd.f32 0.0, %v830
        %832 = vmatmul.bf16.gmra.mxu0 %v585
        %v833 = vpop.f32.mrf.mxu0
        %v834 = vadd.f32 0.0, %v833
        %v835 = vpop.f32.mrf.mxu0
        %v836 = vadd.f32 0.0, %v835
        %837 = vmatmul.bf16.gmra.mxu0 %v587
        %v838 = vpop.f32.mrf.mxu0
        %v839 = vadd.f32 0.0, %v838
        %v840 = vpop.f32.mrf.mxu0
        %v841 = vadd.f32 0.0, %v840
        %842 = vmatmul.bf16.gmra.mxu0 %v589
        %v843 = vpop.f32.mrf.mxu0
        %v844 = vadd.f32 0.0, %v843
        %v845 = vpop.f32.mrf.mxu0
        %v846 = vadd.f32 0.0, %v845
        %847 = vmatmul.bf16.gmra.mxu0 %v591
        %v848 = vpop.f32.mrf.mxu0
        %v849 = vadd.f32 0.0, %v848
        %v850 = vpop.f32.mrf.mxu0
        %v851 = vadd.f32 0.0, %v850
        %852 = vmatmul.bf16.gmra.mxu0 %v593
        %v853 = vpop.f32.mrf.mxu0
        %v854 = vadd.f32 0.0, %v853
        %v855 = vpop.f32.mrf.mxu0
        %v856 = vadd.f32 0.0, %v855
        %857 = vmatmul.bf16.gmra.mxu0 %v595
        %v858 = vpop.f32.mrf.mxu0
        %v859 = vadd.f32 0.0, %v858
        %v860 = vpop.f32.mrf.mxu0
        %v861 = vadd.f32 0.0, %v860
        %862 = vmatmul.bf16.gmra.mxu0 %v597
        %v863 = vpop.f32.mrf.mxu0
        %v864 = vadd.f32 0.0, %v863
        %v865 = vpop.f32.mrf.mxu0
        %v866 = vadd.f32 0.0, %v865
        %867 = vmatmul.bf16.gmra.mxu0 %v599
        %v868 = vpop.f32.mrf.mxu0
        %v869 = vadd.f32 0.0, %v868
        %v870 = vpop.f32.mrf.mxu0
        %v871 = vadd.f32 0.0, %v870
        %872 = vmatmul.bf16.gmra.mxu0 %v601
        %v873 = vpop.f32.mrf.mxu0
        %v874 = vadd.f32 0.0, %v873
        %v875 = vpop.f32.mrf.mxu0
        %v876 = vadd.f32 0.0, %v875
        %877 = vmatmul.bf16.gmra.mxu0 %v603
        %v878 = vpop.f32.mrf.mxu0
        %v879 = vadd.f32 0.0, %v878
        %v880 = vpop.f32.mrf.mxu0
        %v881 = vadd.f32 0.0, %v880
        %882 = vmatmul.bf16.gmra.mxu0 %v605
        %v883 = vpop.f32.mrf.mxu0
        %v884 = vadd.f32 0.0, %v883
        %v885 = vpop.f32.mrf.mxu0
        %v886 = vadd.f32 0.0, %v885
        %887 = vmatmul.bf16.gmra.mxu0 %v607
        %v888 = vpop.f32.mrf.mxu0
        %v889 = vadd.f32 0.0, %v888
        %v890 = vpop.f32.mrf.mxu0
        %v891 = vadd.f32 0.0, %v890
        %892 = vmatmul.bf16.gmra.mxu0 %v609
        %v893 = vpop.f32.mrf.mxu0
        %v894 = vadd.f32 0.0, %v893
        %v895 = vpop.f32.mrf.mxu0
        %v896 = vadd.f32 0.0, %v895
        %897 = vmatmul.bf16.gmra.mxu0 %v611
        %v898 = vpop.f32.mrf.mxu0
        %v899 = vadd.f32 0.0, %v898
        %v900 = vpop.f32.mrf.mxu0
        %v901 = vadd.f32 0.0, %v900
        %902 = vmatmul.bf16.gmra.mxu0 %v613
        %v903 = vpop.f32.mrf.mxu0
        %v904 = vadd.f32 0.0, %v903
        %v905 = vpop.f32.mrf.mxu0
        %v906 = vadd.f32 0.0, %v905
        %907 = vmatmul.bf16.gmra.mxu0 %v615
        %v908 = vpop.f32.mrf.mxu0
        %v909 = vadd.f32 0.0, %v908
        %v910 = vpop.f32.mrf.mxu0
        %v911 = vadd.f32 0.0, %v910
        %912 = vmatmul.bf16.gmra.mxu0 %v617
        %v913 = vpop.f32.mrf.mxu0
        %v914 = vadd.f32 0.0, %v913
        %v915 = vpop.f32.mrf.mxu0
        %v916 = vadd.f32 0.0, %v915
        %917 = vmatmul.bf16.gmra.mxu0 %v619
        %v918 = vpop.f32.mrf.mxu0
        %v919 = vadd.f32 0.0, %v918
        %v920 = vpop.f32.mrf.mxu0
        %v921 = vadd.f32 0.0, %v920
        %922 = vmatmul.bf16.gmra.mxu0 %v621
        %v923 = vpop.f32.mrf.mxu0
        %v924 = vadd.f32 0.0, %v923
        %v925 = vpop.f32.mrf.mxu0
        %v926 = vadd.f32 0.0, %v925
        %927 = vmatmul.bf16.gmra.mxu0 %v623
        %v928 = vpop.f32.mrf.mxu0
        %v929 = vadd.f32 0.0, %v928
        %v930 = vpop.f32.mrf.mxu0
        %v931 = vadd.f32 0.0, %v930
        %932 = vmatmul.bf16.gmra.mxu0 %v625
        %v933 = vpop.f32.mrf.mxu0
        %v934 = vadd.f32 0.0, %v933
        %v935 = vpop.f32.mrf.mxu0
        %v936 = vadd.f32 0.0, %v935
        %937 = vmatmul.bf16.gmra.mxu0 %v627
        %v938 = vpop.f32.mrf.mxu0
        %v939 = vadd.f32 0.0, %v938
        %v940 = vpop.f32.mrf.mxu0
        %v941 = vadd.f32 0.0, %v940
        %942 = vmatmul.bf16.gmra.mxu0 %v629
        %v943 = vpop.f32.mrf.mxu0
        %v944 = vadd.f32 0.0, %v943
        %v945 = vpop.f32.mrf.mxu0
        %v946 = vadd.f32 0.0, %v945
        %947 = vmatmul.bf16.gmra.mxu0 %v631
        %v948 = vpop.f32.mrf.mxu0
        %v949 = vadd.f32 0.0, %v948
        %v950 = vpop.f32.mrf.mxu0
        %v951 = vadd.f32 0.0, %v950
        %952 = vmatmul.bf16.gmra.mxu0 %v633
        %v953 = vpop.f32.mrf.mxu0
        %v954 = vadd.f32 0.0, %v953
        %v955 = vpop.f32.mrf.mxu0
        %v956 = vadd.f32 0.0, %v955
        %957 = vmatmul.bf16.gmra.mxu0 %v635
        %v958 = vpop.f32.mrf.mxu0
        %v959 = vadd.f32 0.0, %v958
        %v960 = vpop.f32.mrf.mxu0
        %v961 = vadd.f32 0.0, %v960
        %962 = vmatmul.bf16.gmra.mxu0 %v637
        %v963 = vpop.f32.mrf.mxu0
        %v964 = vadd.f32 0.0, %v963
        %v965 = vpop.f32.mrf.mxu0
        %v966 = vadd.f32 0.0, %v965
        %967 = vdwg.mxu0
        %968 = vmatpush.bf16.msra.mxu0 %v782
        %969 = vmatpush.bf16.msra.mxu0 %v781
        %970 = vmatpush.bf16.msra.mxu0 %v780
        %971 = vmatpush.bf16.msra.mxu0 %v779
        %972 = vmatpush.bf16.msra.mxu0 %v778
        %973 = vmatpush.bf16.msra.mxu0 %v777
        %974 = vmatpush.bf16.msra.mxu0 %v776
        %975 = vmatpush.bf16.msra.mxu0 %v775
        %976 = vmatmul.bf16.gmra.mxu0 %v576
        %v977 = vpop.f32.mrf.mxu0
        %v978 = vadd.f32 %v809, %v977
        %v979 = vpop.f32.mrf.mxu0
        %v980 = vadd.f32 %v811, %v979
        %981 = vmatmul.bf16.gmra.mxu0 %v578
        %v982 = vpop.f32.mrf.mxu0
        %v983 = vadd.f32 %v814, %v982
        %v984 = vpop.f32.mrf.mxu0
        %v985 = vadd.f32 %v816, %v984
        %986 = vmatmul.bf16.gmra.mxu0 %v580
        %v987 = vpop.f32.mrf.mxu0
        %v988 = vadd.f32 %v819, %v987
        %v989 = vpop.f32.mrf.mxu0
        %v990 = vadd.f32 %v821, %v989
        %991 = vmatmul.bf16.gmra.mxu0 %v582
        %v992 = vpop.f32.mrf.mxu0
        %v993 = vadd.f32 %v824, %v992
        %v994 = vpop.f32.mrf.mxu0
        %v995 = vadd.f32 %v826, %v994
        %996 = vmatmul.bf16.gmra.mxu0 %v584
        %v997 = vpop.f32.mrf.mxu0
        %v998 = vadd.f32 %v829, %v997
        %v999 = vpop.f32.mrf.mxu0
        %v1000 = vadd.f32 %v831, %v999
        %1001 = vmatmul.bf16.gmra.mxu0 %v586
        %v1002 = vpop.f32.mrf.mxu0
        %v1003 = vadd.f32 %v834, %v1002
        %v1004 = vpop.f32.mrf.mxu0
        %v1005 = vadd.f32 %v836, %v1004
        %1006 = vmatmul.bf16.gmra.mxu0 %v588
        %v1007 = vpop.f32.mrf.mxu0
        %v1008 = vadd.f32 %v839, %v1007
        %v1009 = vpop.f32.mrf.mxu0
        %v1010 = vadd.f32 %v841, %v1009
        %1011 = vmatmul.bf16.gmra.mxu0 %v590
        %v1012 = vpop.f32.mrf.mxu0
        %v1013 = vadd.f32 %v844, %v1012
        %v1014 = vpop.f32.mrf.mxu0
        %v1015 = vadd.f32 %v846, %v1014
        %1016 = vmatmul.bf16.gmra.mxu0 %v592
        %v1017 = vpop.f32.mrf.mxu0
        %v1018 = vadd.f32 %v849, %v1017
        %v1019 = vpop.f32.mrf.mxu0
        %v1020 = vadd.f32 %v851, %v1019
        %1021 = vmatmul.bf16.gmra.mxu0 %v594
        %v1022 = vpop.f32.mrf.mxu0
        %v1023 = vadd.f32 %v854, %v1022
        %v1024 = vpop.f32.mrf.mxu0
        %v1025 = vadd.f32 %v856, %v1024
        %1026 = vmatmul.bf16.gmra.mxu0 %v596
        %v1027 = vpop.f32.mrf.mxu0
        %v1028 = vadd.f32 %v859, %v1027
        %v1029 = vpop.f32.mrf.mxu0
        %v1030 = vadd.f32 %v861, %v1029
        %1031 = vmatmul.bf16.gmra.mxu0 %v598
        %v1032 = vpop.f32.mrf.mxu0
        %v1033 = vadd.f32 %v864, %v1032
        %v1034 = vpop.f32.mrf.mxu0
        %v1035 = vadd.f32 %v866, %v1034
        %1036 = vmatmul.bf16.gmra.mxu0 %v600
        %v1037 = vpop.f32.mrf.mxu0
        %v1038 = vadd.f32 %v869, %v1037
        %v1039 = vpop.f32.mrf.mxu0
        %v1040 = vadd.f32 %v871, %v1039
        %1041 = vmatmul.bf16.gmra.mxu0 %v602
        %v1042 = vpop.f32.mrf.mxu0
        %v1043 = vadd.f32 %v874, %v1042
        %v1044 = vpop.f32.mrf.mxu0
        %v1045 = vadd.f32 %v876, %v1044
        %1046 = vmatmul.bf16.gmra.mxu0 %v604
        %v1047 = vpop.f32.mrf.mxu0
        %v1048 = vadd.f32 %v879, %v1047
        %v1049 = vpop.f32.mrf.mxu0
        %v1050 = vadd.f32 %v881, %v1049
        %1051 = vmatmul.bf16.gmra.mxu0 %v606
        %v1052 = vpop.f32.mrf.mxu0
        %v1053 = vadd.f32 %v884, %v1052
        %v1054 = vpop.f32.mrf.mxu0
        %v1055 = vadd.f32 %v886, %v1054
        %1056 = vmatmul.bf16.gmra.mxu0 %v608
        %v1057 = vpop.f32.mrf.mxu0
        %v1058 = vadd.f32 %v889, %v1057
        %v1059 = vpop.f32.mrf.mxu0
        %v1060 = vadd.f32 %v891, %v1059
        %1061 = vmatmul.bf16.gmra.mxu0 %v610
        %v1062 = vpop.f32.mrf.mxu0
        %v1063 = vadd.f32 %v894, %v1062
        %v1064 = vpop.f32.mrf.mxu0
        %v1065 = vadd.f32 %v896, %v1064
        %1066 = vmatmul.bf16.gmra.mxu0 %v612
        %v1067 = vpop.f32.mrf.mxu0
        %v1068 = vadd.f32 %v899, %v1067
        %v1069 = vpop.f32.mrf.mxu0
        %v1070 = vadd.f32 %v901, %v1069
        %1071 = vmatmul.bf16.gmra.mxu0 %v614
        %v1072 = vpop.f32.mrf.mxu0
        %v1073 = vadd.f32 %v904, %v1072
        %v1074 = vpop.f32.mrf.mxu0
        %v1075 = vadd.f32 %v906, %v1074
        %1076 = vmatmul.bf16.gmra.mxu0 %v616
        %v1077 = vpop.f32.mrf.mxu0
        %v1078 = vadd.f32 %v909, %v1077
        %v1079 = vpop.f32.mrf.mxu0
        %v1080 = vadd.f32 %v911, %v1079
        %1081 = vmatmul.bf16.gmra.mxu0 %v618
        %v1082 = vpop.f32.mrf.mxu0
        %v1083 = vadd.f32 %v914, %v1082
        %v1084 = vpop.f32.mrf.mxu0
        %v1085 = vadd.f32 %v916, %v1084
        %1086 = vmatmul.bf16.gmra.mxu0 %v620
        %v1087 = vpop.f32.mrf.mxu0
        %v1088 = vadd.f32 %v919, %v1087
        %v1089 = vpop.f32.mrf.mxu0
        %v1090 = vadd.f32 %v921, %v1089
        %1091 = vmatmul.bf16.gmra.mxu0 %v622
        %v1092 = vpop.f32.mrf.mxu0
        %v1093 = vadd.f32 %v924, %v1092
        %v1094 = vpop.f32.mrf.mxu0
        %v1095 = vadd.f32 %v926, %v1094
        %1096 = vmatmul.bf16.gmra.mxu0 %v624
        %v1097 = vpop.f32.mrf.mxu0
        %v1098 = vadd.f32 %v929, %v1097
        %v1099 = vpop.f32.mrf.mxu0
        %v1100 = vadd.f32 %v931, %v1099
        %1101 = vmatmul.bf16.gmra.mxu0 %v626
        %v1102 = vpop.f32.mrf.mxu0
        %v1103 = vadd.f32 %v934, %v1102
        %v1104 = vpop.f32.mrf.mxu0
        %v1105 = vadd.f32 %v936, %v1104
        %1106 = vmatmul.bf16.gmra.mxu0 %v628
        %v1107 = vpop.f32.mrf.mxu0
        %v1108 = vadd.f32 %v939, %v1107
        %v1109 = vpop.f32.mrf.mxu0
        %v1110 = vadd.f32 %v941, %v1109
        %1111 = vmatmul.bf16.gmra.mxu0 %v630
        %v1112 = vpop.f32.mrf.mxu0
        %v1113 = vadd.f32 %v944, %v1112
        %v1114 = vpop.f32.mrf.mxu0
        %v1115 = vadd.f32 %v946, %v1114
        %1116 = vmatmul.bf16.gmra.mxu0 %v632
        %v1117 = vpop.f32.mrf.mxu0
        %v1118 = vadd.f32 %v949, %v1117
        %v1119 = vpop.f32.mrf.mxu0
        %v1120 = vadd.f32 %v951, %v1119
        %1121 = vmatmul.bf16.gmra.mxu0 %v634
        %v1122 = vpop.f32.mrf.mxu0
        %v1123 = vadd.f32 %v954, %v1122
        %v1124 = vpop.f32.mrf.mxu0
        %v1125 = vadd.f32 %v956, %v1124
        %1126 = vmatmul.bf16.gmra.mxu0 %v636
        %v1127 = vpop.f32.mrf.mxu0
        %v1128 = vadd.f32 %v959, %v1127
        %v1129 = vpop.f32.mrf.mxu0
        %v1130 = vadd.f32 %v961, %v1129
        %1131 = vmatmul.bf16.gmra.mxu0 %v638
        %v1132 = vpop.f32.mrf.mxu0
        %v1133 = vadd.f32 %v964, %v1132
        %v1134 = vpop.f32.mrf.mxu0
        %v1135 = vadd.f32 %v966, %v1134
        %1136 = vdwg.mxu0
        %v1137 = vld [vmem:[%s282] sm:$0x1]
        %v1138 = vld [vmem:[%s285] sm:$0x1]
        %v1140 = vperm.slane %v1137, 0
        %v1142 = vmul.f32 %v978, %v1140
        %v1143 = vmul.f32 %v980, %v1140
        %v1144 = vmul.f32 %v983, %v1140
        %v1145 = vmul.f32 %v985, %v1140
        %v1146 = vmul.f32 %v988, %v1140
        %v1147 = vmul.f32 %v990, %v1140
        %v1148 = vmul.f32 %v993, %v1140
        %v1149 = vmul.f32 %v995, %v1140
        %v1150 = vmul.f32 %v998, %v1140
        %v1151 = vmul.f32 %v1000, %v1140
        %v1152 = vmul.f32 %v1003, %v1140
        %v1153 = vmul.f32 %v1005, %v1140
        %v1154 = vmul.f32 %v1008, %v1140
        %v1155 = vmul.f32 %v1010, %v1140
        %v1156 = vmul.f32 %v1013, %v1140
        %v1157 = vmul.f32 %v1015, %v1140
        %v1158 = vmul.f32 %v1018, %v1140
        %v1159 = vmul.f32 %v1020, %v1140
        %v1160 = vmul.f32 %v1023, %v1140
        %v1161 = vmul.f32 %v1025, %v1140
        %v1162 = vmul.f32 %v1028, %v1140
        %v1163 = vmul.f32 %v1030, %v1140
        %v1164 = vmul.f32 %v1033, %v1140
        %v1165 = vmul.f32 %v1035, %v1140
        %v1166 = vmul.f32 %v1038, %v1140
        %v1167 = vmul.f32 %v1040, %v1140
        %v1168 = vmul.f32 %v1043, %v1140
        %v1169 = vmul.f32 %v1045, %v1140
        %v1170 = vmul.f32 %v1048, %v1140
        %v1171 = vmul.f32 %v1050, %v1140
        %v1172 = vmul.f32 %v1053, %v1140
        %v1173 = vmul.f32 %v1055, %v1140
        %v1174 = vmul.f32 %v1058, %v1140
        %v1175 = vmul.f32 %v1060, %v1140
        %v1176 = vmul.f32 %v1063, %v1140
        %v1177 = vmul.f32 %v1065, %v1140
        %v1178 = vmul.f32 %v1068, %v1140
        %v1179 = vmul.f32 %v1070, %v1140
        %v1180 = vmul.f32 %v1073, %v1140
        %v1181 = vmul.f32 %v1075, %v1140
        %v1182 = vmul.f32 %v1078, %v1140
        %v1183 = vmul.f32 %v1080, %v1140
        %v1184 = vmul.f32 %v1083, %v1140
        %v1185 = vmul.f32 %v1085, %v1140
        %v1186 = vmul.f32 %v1088, %v1140
        %v1187 = vmul.f32 %v1090, %v1140
        %v1188 = vmul.f32 %v1093, %v1140
        %v1189 = vmul.f32 %v1095, %v1140
        %v1190 = vmul.f32 %v1098, %v1140
        %v1191 = vmul.f32 %v1100, %v1140
        %v1192 = vmul.f32 %v1103, %v1140
        %v1193 = vmul.f32 %v1105, %v1140
        %v1194 = vmul.f32 %v1108, %v1140
        %v1195 = vmul.f32 %v1110, %v1140
        %v1196 = vmul.f32 %v1113, %v1140
        %v1197 = vmul.f32 %v1115, %v1140
        %v1198 = vmul.f32 %v1118, %v1140
        %v1199 = vmul.f32 %v1120, %v1140
        %v1200 = vmul.f32 %v1123, %v1140
        %v1201 = vmul.f32 %v1125, %v1140
        %v1202 = vmul.f32 %v1128, %v1140
        %v1203 = vmul.f32 %v1130, %v1140
        %v1204 = vmul.f32 %v1133, %v1140
        %v1205 = vmul.f32 %v1135, %v1140
        %v1207 = vperm.slane %v1138, 0
        %v1209 = vadd.f32 %v1142, %v1207
        %v1210 = vadd.f32 %v1143, %v1207
        %v1211 = vadd.f32 %v1144, %v1207
        %v1212 = vadd.f32 %v1145, %v1207
        %v1213 = vadd.f32 %v1146, %v1207
        %v1214 = vadd.f32 %v1147, %v1207
        %v1215 = vadd.f32 %v1148, %v1207
        %v1216 = vadd.f32 %v1149, %v1207
        %v1217 = vadd.f32 %v1150, %v1207
        %v1218 = vadd.f32 %v1151, %v1207
        %v1219 = vadd.f32 %v1152, %v1207
        %v1220 = vadd.f32 %v1153, %v1207
        %v1221 = vadd.f32 %v1154, %v1207
        %v1222 = vadd.f32 %v1155, %v1207
        %v1223 = vadd.f32 %v1156, %v1207
        %v1224 = vadd.f32 %v1157, %v1207
        %v1225 = vadd.f32 %v1158, %v1207
        %v1226 = vadd.f32 %v1159, %v1207
        %v1227 = vadd.f32 %v1160, %v1207
        %v1228 = vadd.f32 %v1161, %v1207
        %v1229 = vadd.f32 %v1162, %v1207
        %v1230 = vadd.f32 %v1163, %v1207
        %v1231 = vadd.f32 %v1164, %v1207
        %v1232 = vadd.f32 %v1165, %v1207
        %v1233 = vadd.f32 %v1166, %v1207
        %v1234 = vadd.f32 %v1167, %v1207
        %v1235 = vadd.f32 %v1168, %v1207
        %v1236 = vadd.f32 %v1169, %v1207
        %v1237 = vadd.f32 %v1170, %v1207
        %v1238 = vadd.f32 %v1171, %v1207
        %v1239 = vadd.f32 %v1172, %v1207
        %v1240 = vadd.f32 %v1173, %v1207
        %v1241 = vadd.f32 %v1174, %v1207
        %v1242 = vadd.f32 %v1175, %v1207
        %v1243 = vadd.f32 %v1176, %v1207
        %v1244 = vadd.f32 %v1177, %v1207
        %v1245 = vadd.f32 %v1178, %v1207
        %v1246 = vadd.f32 %v1179, %v1207
        %v1247 = vadd.f32 %v1180, %v1207
        %v1248 = vadd.f32 %v1181, %v1207
        %v1249 = vadd.f32 %v1182, %v1207
        %v1250 = vadd.f32 %v1183, %v1207
        %v1251 = vadd.f32 %v1184, %v1207
        %v1252 = vadd.f32 %v1185, %v1207
        %v1253 = vadd.f32 %v1186, %v1207
        %v1254 = vadd.f32 %v1187, %v1207
        %v1255 = vadd.f32 %v1188, %v1207
        %v1256 = vadd.f32 %v1189, %v1207
        %v1257 = vadd.f32 %v1190, %v1207
        %v1258 = vadd.f32 %v1191, %v1207
        %v1259 = vadd.f32 %v1192, %v1207
        %v1260 = vadd.f32 %v1193, %v1207
        %v1261 = vadd.f32 %v1194, %v1207
        %v1262 = vadd.f32 %v1195, %v1207
        %v1263 = vadd.f32 %v1196, %v1207
        %v1264 = vadd.f32 %v1197, %v1207
        %v1265 = vadd.f32 %v1198, %v1207
        %v1266 = vadd.f32 %v1199, %v1207
        %v1267 = vadd.f32 %v1200, %v1207
        %v1268 = vadd.f32 %v1201, %v1207
        %v1269 = vadd.f32 %v1202, %v1207
        %v1270 = vadd.f32 %v1203, %v1207
        %v1271 = vadd.f32 %v1204, %v1207
        %v1272 = vadd.f32 %v1205, %v1207
        %v1273 = vpack.c.bf16 %v1209, %v1209
        %v1274 = vpack.c.bf16 %v1210, %v1210
        %v1275 = vpack.c.bf16 %v1211, %v1211
        %v1276 = vpack.c.bf16 %v1212, %v1212
        %v1277 = vpack.c.bf16 %v1213, %v1213
        %v1278 = vpack.c.bf16 %v1214, %v1214
        %v1279 = vpack.c.bf16 %v1215, %v1215
        %v1280 = vpack.c.bf16 %v1216, %v1216
        %v1281 = vpack.c.bf16 %v1217, %v1217
        %v1282 = vpack.c.bf16 %v1218, %v1218
        %v1283 = vpack.c.bf16 %v1219, %v1219
        %v1284 = vpack.c.bf16 %v1220, %v1220
        %v1285 = vpack.c.bf16 %v1221, %v1221
        %v1286 = vpack.c.bf16 %v1222, %v1222
        %v1287 = vpack.c.bf16 %v1223, %v1223
        %v1288 = vpack.c.bf16 %v1224, %v1224
        %v1289 = vpack.c.bf16 %v1225, %v1225
        %v1290 = vpack.c.bf16 %v1226, %v1226
        %v1291 = vpack.c.bf16 %v1227, %v1227
        %v1292 = vpack.c.bf16 %v1228, %v1228
        %v1293 = vpack.c.bf16 %v1229, %v1229
        %v1294 = vpack.c.bf16 %v1230, %v1230
        %v1295 = vpack.c.bf16 %v1231, %v1231
        %v1296 = vpack.c.bf16 %v1232, %v1232
        %v1297 = vpack.c.bf16 %v1233, %v1233
        %v1298 = vpack.c.bf16 %v1234, %v1234
        %v1299 = vpack.c.bf16 %v1235, %v1235
        %v1300 = vpack.c.bf16 %v1236, %v1236
        %v1301 = vpack.c.bf16 %v1237, %v1237
        %v1302 = vpack.c.bf16 %v1238, %v1238
        %v1303 = vpack.c.bf16 %v1239, %v1239
        %v1304 = vpack.c.bf16 %v1240, %v1240
        %v1305 = vpack.c.bf16 %v1241, %v1241
        %v1306 = vpack.c.bf16 %v1242, %v1242
        %v1307 = vpack.c.bf16 %v1243, %v1243
        %v1308 = vpack.c.bf16 %v1244, %v1244
        %v1309 = vpack.c.bf16 %v1245, %v1245
        %v1310 = vpack.c.bf16 %v1246, %v1246
        %v1311 = vpack.c.bf16 %v1247, %v1247
        %v1312 = vpack.c.bf16 %v1248, %v1248
        %v1313 = vpack.c.bf16 %v1249, %v1249
        %v1314 = vpack.c.bf16 %v1250, %v1250
        %v1315 = vpack.c.bf16 %v1251, %v1251
        %v1316 = vpack.c.bf16 %v1252, %v1252
        %v1317 = vpack.c.bf16 %v1253, %v1253
        %v1318 = vpack.c.bf16 %v1254, %v1254
        %v1319 = vpack.c.bf16 %v1255, %v1255
        %v1320 = vpack.c.bf16 %v1256, %v1256
        %v1321 = vpack.c.bf16 %v1257, %v1257
        %v1322 = vpack.c.bf16 %v1258, %v1258
        %v1323 = vpack.c.bf16 %v1259, %v1259
        %v1324 = vpack.c.bf16 %v1260, %v1260
        %v1325 = vpack.c.bf16 %v1261, %v1261
        %v1326 = vpack.c.bf16 %v1262, %v1262
        %v1327 = vpack.c.bf16 %v1263, %v1263
        %v1328 = vpack.c.bf16 %v1264, %v1264
        %v1329 = vpack.c.bf16 %v1265, %v1265
        %v1330 = vpack.c.bf16 %v1266, %v1266
        %v1331 = vpack.c.bf16 %v1267, %v1267
        %v1332 = vpack.c.bf16 %v1268, %v1268
        %v1333 = vpack.c.bf16 %v1269, %v1269
        %v1334 = vpack.c.bf16 %v1270, %v1270
        %v1335 = vpack.c.bf16 %v1271, %v1271
        %v1336 = vpack.c.bf16 %v1272, %v1272
        %1337 = vst [vmem:[%s278] sm:$0xf] %v1273
        %1338 = vst [vmem:[%s278 + $0x4] sm:$0xf] %v1274
        %1339 = vst [vmem:[%s278 + $0x8] sm:$0xf] %v1275
        %1340 = vst [vmem:[%s278 + $0xc] sm:$0xf] %v1276
        %1341 = vst [vmem:[%s278 + $0x10] sm:$0xf] %v1277
        %1342 = vst [vmem:[%s278 + $0x14] sm:$0xf] %v1278
        %1343 = vst [vmem:[%s278 + $0x18] sm:$0xf] %v1279
        %1344 = vst [vmem:[%s278 + $0x1c] sm:$0xf] %v1280
        %1345 = vst [vmem:[%s278 + $0x20] sm:$0xf] %v1281
        %1346 = vst [vmem:[%s278 + $0x24] sm:$0xf] %v1282
        %1347 = vst [vmem:[%s278 + $0x28] sm:$0xf] %v1283
        %1348 = vst [vmem:[%s278 + $0x2c] sm:$0xf] %v1284
        %1349 = vst [vmem:[%s278 + $0x30] sm:$0xf] %v1285
        %1350 = vst [vmem:[%s278 + $0x34] sm:$0xf] %v1286
        %1351 = vst [vmem:[%s278 + $0x38] sm:$0xf] %v1287
        %1352 = vst [vmem:[%s278 + $0x3c] sm:$0xf] %v1288
        %1353 = vst [vmem:[%s278 + $0x40] sm:$0xf] %v1289
        %1354 = vst [vmem:[%s278 + $0x44] sm:$0xf] %v1290
        %1355 = vst [vmem:[%s278 + $0x48] sm:$0xf] %v1291
        %1356 = vst [vmem:[%s278 + $0x4c] sm:$0xf] %v1292
        %1357 = vst [vmem:[%s278 + $0x50] sm:$0xf] %v1293
        %1358 = vst [vmem:[%s278 + $0x54] sm:$0xf] %v1294
        %1359 = vst [vmem:[%s278 + $0x58] sm:$0xf] %v1295
        %1360 = vst [vmem:[%s278 + $0x5c] sm:$0xf] %v1296
        %1361 = vst [vmem:[%s278 + $0x60] sm:$0xf] %v1297
        %1362 = vst [vmem:[%s278 + $0x64] sm:$0xf] %v1298
        %1363 = vst [vmem:[%s278 + $0x68] sm:$0xf] %v1299
        %1364 = vst [vmem:[%s278 + $0x6c] sm:$0xf] %v1300
        %1365 = vst [vmem:[%s278 + $0x70] sm:$0xf] %v1301
        %1366 = vst [vmem:[%s278 + $0x74] sm:$0xf] %v1302
        %1367 = vst [vmem:[%s278 + $0x78] sm:$0xf] %v1303
        %1368 = vst [vmem:[%s278 + $0x7c] sm:$0xf] %v1304
        %1369 = vst [vmem:[%s278 + $0x80] sm:$0xf] %v1305
        %1370 = vst [vmem:[%s278 + $0x84] sm:$0xf] %v1306
        %1371 = vst [vmem:[%s278 + $0x88] sm:$0xf] %v1307
        %1372 = vst [vmem:[%s278 + $0x8c] sm:$0xf] %v1308
        %1373 = vst [vmem:[%s278 + $0x90] sm:$0xf] %v1309
        %1374 = vst [vmem:[%s278 + $0x94] sm:$0xf] %v1310
        %1375 = vst [vmem:[%s278 + $0x98] sm:$0xf] %v1311
        %1376 = vst [vmem:[%s278 + $0x9c] sm:$0xf] %v1312
        %1377 = vst [vmem:[%s278 + $0xa0] sm:$0xf] %v1313
        %1378 = vst [vmem:[%s278 + $0xa4] sm:$0xf] %v1314
        %1379 = vst [vmem:[%s278 + $0xa8] sm:$0xf] %v1315
        %1380 = vst [vmem:[%s278 + $0xac] sm:$0xf] %v1316
        %1381 = vst [vmem:[%s278 + $0xb0] sm:$0xf] %v1317
        %1382 = vst [vmem:[%s278 + $0xb4] sm:$0xf] %v1318
        %1383 = vst [vmem:[%s278 + $0xb8] sm:$0xf] %v1319
        %1384 = vst [vmem:[%s278 + $0xbc] sm:$0xf] %v1320
        %1385 = vst [vmem:[%s278 + $0xc0] sm:$0xf] %v1321
        %1386 = vst [vmem:[%s278 + $0xc4] sm:$0xf] %v1322
        %1387 = vst [vmem:[%s278 + $0xc8] sm:$0xf] %v1323
        %1388 = vst [vmem:[%s278 + $0xcc] sm:$0xf] %v1324
        %1389 = vst [vmem:[%s278 + $0xd0] sm:$0xf] %v1325
        %1390 = vst [vmem:[%s278 + $0xd4] sm:$0xf] %v1326
        %1391 = vst [vmem:[%s278 + $0xd8] sm:$0xf] %v1327
        %1392 = vst [vmem:[%s278 + $0xdc] sm:$0xf] %v1328
        %1393 = vst [vmem:[%s278 + $0xe0] sm:$0xf] %v1329
        %1394 = vst [vmem:[%s278 + $0xe4] sm:$0xf] %v1330
        %1395 = vst [vmem:[%s278 + $0xe8] sm:$0xf] %v1331
        %1396 = vst [vmem:[%s278 + $0xec] sm:$0xf] %v1332
        %1397 = vst [vmem:[%s278 + $0xf0] sm:$0xf] %v1333
        %1398 = vst [vmem:[%s278 + $0xf4] sm:$0xf] %v1334
        %1399 = vst [vmem:[%s278 + $0xf8] sm:$0xf] %v1335
        %1400 = vst [vmem:[%s278 + $0xfc] sm:$0xf] %v1336
        %s1401 = sand.u32 %s148, 1
        %s1402 = scalar_lea.sflag [#allocation4], %s1401
        %s1403 = sand.u32 %s148, 1
        %s1404 = smul.addr %s1403, 256
        %s1405 = scalar_lea.vmem [#allocation7], %s1404
        // Predicated region
        $region45: #{tpu_custom_call.1} parent=35 // pred_check
          %p1406 = pneg %p158
        $region46: #{tpu_custom_call.1} parent=35 // pred_check_branch
          %1408 = sbr.rel (%p1406) target = $region48
        $region47: #{tpu_custom_call.1} parent=35 // pred_region
          %s1409 = smul.u32 64, %s26
          %1411 = vsyncadd %s1402, 0
          %s1412 = sadd.s32 %s27, %s1409
          %s1413 = smul.addr %s1412, 4
          %s1414 = scalar_lea.hbm %s4, %s1413
          %s1415 = sshll.u32 %s1405, 4
          %s1416 = int_to_ptr.vmem [resolvable:$true] %s1415
          %s1417 = sshll.u32 %s1414, 4
          %s1418 = int_to_ptr.hbm [resolvable:$true] %s1417
          %1423 = dma.vmem_to_hbm [thread:$0]  %s1416, 4096, %s1418, %s1402, 64, 64, 4
        $region48: #{tpu_custom_call.1} parent=35 // pred_fallthru
          _
      $region36: #{tpu_custom_call.1} parent=5 // pred_fallthru
        _
      %p1424 = scmp.le.s32.totalorder 2, %s17
      // Predicated region
      $region49: #{tpu_custom_call.1} parent=5 // pred_check
        %p1425 = pneg %p1424
      $region50: #{tpu_custom_call.1} parent=5 // pred_check_branch
        %1427 = sbr.rel (%p1425) target = $region52
      $region51: #{tpu_custom_call.1} parent=5 // pred_region
        %s1428 = ssub.s32 %s17, 2
        // Predicated region
        $region53: #{tpu_custom_call.1} parent=51 // pred_check
          %p1429 = pneg %p164
        $region54: #{tpu_custom_call.1} parent=51 // pred_check_branch
          %1431 = sbr.rel (%p1429) target = $region56
        $region55: #{tpu_custom_call.1} parent=51 // pred_region
          %s1432 = sand.u32 %s149, 1
          %s1433 = scalar_lea.sflag [#allocation4], %s1432
          %s1434 = sand.u32 %s149, 1
          %s1435 = smul.addr %s1434, 256
          %s1436 = scalar_lea.vmem [#allocation7], %s1435
          %1438 = dma.done %s1433, 4096
        $region56: #{tpu_custom_call.1} parent=51 // pred_fallthru
          _
      $region52: #{tpu_custom_call.1} parent=5 // pred_fallthru
        _
    $region6: #{tpu_custom_call.1} parent=1 // loop_footer
      %s21 = sadd.s32 1, %s17
    $region7: #{tpu_custom_call.1} parent=1 // loop_footer_branch
      %16 = sbr.rel target = $region3
    $region8: #{tpu_custom_call.1} parent=1 // loop_exit
      _
    %1439 = vsyncpa [#allocation3], 1
    %s1440 = scalar_lea.sflag [#allocation3], 1
    %1441 = vsyncpa %s1440, 1
    %1442 = vsyncpa [#allocation6], 1
    %1443 = vsyncpa [#allocation4], 1
    %s1444 = scalar_lea.sflag [#allocation4], 1
    %1445 = vsyncpa %s1444, 1

</llo_original>
